<compile_context>
chip_gen: v7x
topology: tpu7x:2x2x1
jax: 0.10.0
libtpu: 0.0.40
codegen_flags: <defaults>
</compile_context>

<pallas_src>
import functools

import jax
import jax.numpy as jnp
import numpy as np
from jax.experimental import pallas as pl
from jax.experimental.pallas import tpu as pltpu


def _round_up(x, m):
    return ((x + m - 1) // m) * m


def _pick_tile(dim, prefer=512):
    """Largest of {prefer, prefer/2, ..., 128} that divides `dim` (dim % 128 == 0)."""
    t = prefer
    while t > 128 and dim % t:
        t //= 2
    return min(t, dim)


def _matmul_bias_kernel(a_ref, b_ref, bias_ref, o_ref, acc_ref, *, add_bias):
    """One (tm, tn) output tile of A @ B (+ bias), accumulated over the k-grid axis."""
    @pl.when(pl.program_id(2) == 0)
    def _():
        acc_ref[...] = jnp.zeros_like(acc_ref)

    acc_ref[...] += jnp.dot(a_ref[...], b_ref[...],
                            preferred_element_type=jnp.float32)

    @pl.when(pl.program_id(2) == pl.num_programs(2) - 1)
    def _():
        r = acc_ref[...]
        if add_bias:
            r = r + bias_ref[...].astype(jnp.float32)   # (1, tn) broadcasts
        o_ref[...] = r.astype(o_ref.dtype)


def _tiled_matmul(a, b, bias2d, *, out_dtype, add_bias, tm, tn, tk):
    """A: (M, K), B: (K, Np), bias2d: (1, Np).  All dims divisible by tiles."""
    M, K = a.shape
    _, Np = b.shape
    grid = (M // tm, Np // tn, K // tk)
    kernel = functools.partial(_matmul_bias_kernel, add_bias=add_bias)
    return pl.pallas_call(
        kernel,
        out_shape=jax.ShapeDtypeStruct((M, Np), out_dtype),
        grid_spec=pltpu.PrefetchScalarGridSpec(
            num_scalar_prefetch=0,
            grid=grid,
            in_specs=[
                pl.BlockSpec((tm, tk), lambda i, j, kk: (i, kk)),   # A tile
                pl.BlockSpec((tk, tn), lambda i, j, kk: (kk, j)),   # B tile
                pl.BlockSpec((1, tn), lambda i, j, kk: (0, j)),     # bias tile
            ],
            out_specs=pl.BlockSpec((tm, tn), lambda i, j, kk: (i, j)),
            scratch_shapes=[pltpu.VMEM((tm, tn), jnp.float32)],
        ),
        compiler_params=pltpu.CompilerParams(
            dimension_semantics=("parallel", "parallel", "arbitrary"),
            vmem_limit_bytes=48 << 20,   # leaves headroom on v7x's 64 MiB VMEM
        ),
    )(a, b, bias2d)


def sgc_forward(x, adj, w, b, *, k, tm=256, tk=256):
    """SGC forward.

    x:   (N, nfeat)  float32
    adj: (N, N)      float32 (dense stand-in for the sparse adjacency)
    w:   (nfeat, nclass)  = W.T of nn.Linear
    b:   (nclass,)
    """
    N, F = x.shape
    C = w.shape[1]

    # Lane-dense / MXU-friendly padding.
    Cpad = _round_up(C, 128)
    Fpad = _round_up(F, 128)
    Npad = _round_up(N, max(tm, tk))

    x_p = jnp.pad(x, ((0, Npad - N), (0, Fpad - F))).astype(jnp.bfloat16)
    w_p = jnp.pad(w, ((0, Fpad - F), (0, Cpad - C))).astype(jnp.bfloat16)
    adj_p = jnp.pad(adj, ((0, Npad - N), (0, Npad - N))).astype(jnp.bfloat16)
    b_p = jnp.pad(b.astype(jnp.float32), (0, Cpad - C)).reshape(1, Cpad)

    tn = _pick_tile(Cpad, 512)
    tkf = _pick_tile(Fpad, 512)

    # 1) Linear head first:  h0 = x @ W^T   (exact reorder; bias deferred).
    h = _tiled_matmul(
        x_p, w_p, b_p,
        out_dtype=(jnp.float32 if k == 0 else jnp.bfloat16),
        add_bias=(k == 0),
        tm=tm, tn=tn, tk=tkf,
    )

    # 2) k propagation hops on the narrow (Npad, Cpad) slab.  One pallas_call
    #    per hop: every hop needs the complete previous h.  Bias fused into the
    #    finalize of the last hop.
    for hop in range(k):
        last = hop == k - 1
        h = _tiled_matmul(
            adj_p, h, b_p,
            out_dtype=(jnp.float32 if last else jnp.bfloat16),
            add_bias=last,
            tm=tm, tn=tn, tk=tk,
        )

    return h[:N, :C]


if __name__ == "__main__":
    # Small synthetic problem consistent with the module's forward.
    N, NFEAT, NCLASS, K = 200, 48, 7, 2

    key = jax.random.PRNGKey(0)
    kx, ka, kw, kb = jax.random.split(key, 4)

    x = jax.random.normal(kx, (N, NFEAT), dtype=jnp.float32)

    # Dense, row-normalized adjacency with self-loops (stand-in for sparse adj).
    adj_raw = (jax.random.uniform(ka, (N, N)) < 0.1).astype(jnp.float32)
    adj_raw = adj_raw + jnp.eye(N, dtype=jnp.float32)
    adj = adj_raw / jnp.sum(adj_raw, axis=1, keepdims=True)

    # nn.Linear(nfeat, nclass) parameters (PyTorch-style uniform init).
    bound = 1.0 / np.sqrt(NFEAT)
    w_pt = jax.random.uniform(kw, (NCLASS, NFEAT), minval=-bound, maxval=bound,
                              dtype=jnp.float32)
    b_pt = jax.random.uniform(kb, (NCLASS,), minval=-bound, maxval=bound,
                              dtype=jnp.float32)
    w = w_pt.T  # (nfeat, nclass) for the kernel

    fwd = jax.jit(functools.partial(sgc_forward, k=K))
    out = jax.block_until_ready(fwd(x, adj, w, b_pt))

    # Pure-JAX f32 reference with the ORIGINAL op order (propagate, then head).
    h_ref = x
    for _ in range(K):
        h_ref = adj @ h_ref
    ref = h_ref @ w + b_pt

    # Loose tolerance because the kernel intentionally quantizes adj/x/W/h to
    # bf16 (f32 MXU accumulation); observed error is ~1e-2 at these magnitudes.
    np.testing.assert_allclose(np.asarray(out), np.asarray(ref),
                               rtol=5e-2, atol=5e-2)
    print("KERNEL_OK")
</pallas_src>

<mosaic_0001>
module attributes {stable_mosaic.version = 11 : i64} {
  func.func @_matmul_bias_kernel(%arg0: i32, %arg1: i32, %arg2: i32, %arg3: memref<256x128xbf16, #tpu.memory_space<vmem>>, %arg4: memref<128x128xbf16, #tpu.memory_space<vmem>>, %arg5: memref<1x128xf32, #tpu.memory_space<vmem>>, %arg6: memref<256x128xbf16, #tpu.memory_space<vmem>>, %arg7: memref<256x128xf32, #tpu.memory_space<vmem>>) attributes {dimension_semantics = [#tpu.dimension_semantics<parallel>, #tpu.dimension_semantics<parallel>, #tpu.dimension_semantics<arbitrary>], iteration_bounds = array<i64: 1, 1, 1>, scalar_prefetch = 0 : i64, scratch_operands = 1 : i64, tpu.core_type = #tpu.core_type<tc>, window_params = [{transform_indices = @transform_0, window_bounds = array<i64: 256, 128>}, {transform_indices = @transform_1, window_bounds = array<i64: 128, 128>}, {transform_indices = @transform_2, window_bounds = array<i64: 1, 128>}, {transform_indices = @transform_3, window_bounds = array<i64: 256, 128>}]} {
    %c0_i32 = arith.constant 0 : i32
    %0 = arith.cmpi eq, %arg2, %c0_i32 : i32
    %1 = arith.extui %0 : i1 to i32
    %c0_i32_0 = arith.constant 0 : i32
    %2 = arith.cmpi ne, %1, %c0_i32_0 : i32
    scf.if %2 {
      %cst_10 = arith.constant 0.000000e+00 : f32
      %12 = vector.broadcast %cst_10 : f32 to vector<256x128xf32>
      %c0_11 = arith.constant 0 : index
      %c0_12 = arith.constant 0 : index
      %13 = vector.load %arg7[%c0_11, %c0_12] : memref<256x128xf32, #tpu.memory_space<vmem>>, vector<256x128xf32>
      tpu.vector_store %arg7[%c0_11, %c0_12], %12 {strides = array<i32>} : memref<256x128xf32, #tpu.memory_space<vmem>>, vector<256x128xf32>,
    } else {
    }
    %c0 = arith.constant 0 : index
    %c0_1 = arith.constant 0 : index
    %3 = vector.load %arg7[%c0, %c0_1] : memref<256x128xf32, #tpu.memory_space<vmem>>, vector<256x128xf32>
    %c0_2 = arith.constant 0 : index
    %c0_3 = arith.constant 0 : index
    %4 = vector.load %arg3[%c0_2, %c0_3] : memref<256x128xbf16, #tpu.memory_space<vmem>>, vector<256x128xbf16>
    %c0_4 = arith.constant 0 : index
    %c0_5 = arith.constant 0 : index
    %5 = vector.load %arg4[%c0_4, %c0_5] : memref<128x128xbf16, #tpu.memory_space<vmem>>, vector<128x128xbf16>
    %cst = arith.constant dense<0.000000e+00> : vector<256x128xf32>
    %6 = tpu.matmul %4, %5, %cst {dimension_numbers = #tpu.dot_dimension_numbers<[1], [0], [0], [1], [0, 0, 1, 1], [], []>} : vector<256x128xbf16>, vector<128x128xbf16>, vector<256x128xf32> -> vector<256x128xf32>
    %7 = arith.addf %3, %6 : vector<256x128xf32>
    %c0_6 = arith.constant 0 : index
    %c0_7 = arith.constant 0 : index
    %8 = vector.load %arg7[%c0_6, %c0_7] : memref<256x128xf32, #tpu.memory_space<vmem>>, vector<256x128xf32>
    tpu.vector_store %arg7[%c0_6, %c0_7], %7 {strides = array<i32>} : memref<256x128xf32, #tpu.memory_space<vmem>>, vector<256x128xf32>,
    %c0_i32_8 = arith.constant 0 : i32
    %9 = arith.cmpi eq, %arg2, %c0_i32_8 : i32
    %10 = arith.extui %9 : i1 to i32
    %c0_i32_9 = arith.constant 0 : i32
    %11 = arith.cmpi ne, %10, %c0_i32_9 : i32
    scf.if %11 {
      %c0_10 = arith.constant 0 : index
      %c0_11 = arith.constant 0 : index
      %12 = vector.load %arg7[%c0_10, %c0_11] : memref<256x128xf32, #tpu.memory_space<vmem>>, vector<256x128xf32>
      %13 = arith.truncf %12 : vector<256x128xf32> to vector<256x128xbf16>
      %c0_12 = arith.constant 0 : index
      %c0_13 = arith.constant 0 : index
      %14 = vector.load %arg6[%c0_12, %c0_13] : memref<256x128xbf16, #tpu.memory_space<vmem>>, vector<256x128xbf16>
      tpu.vector_store %arg6[%c0_12, %c0_13], %13 {strides = array<i32>} : memref<256x128xbf16, #tpu.memory_space<vmem>>, vector<256x128xbf16>,
    } else {
    }
    return
  }
  func.func @transform_0(%arg0: i32, %arg1: i32, %arg2: i32) -> (i32, i32) {
    %c0_i32 = arith.constant 0 : i32
    return %arg0, %arg2 : i32, i32
  }
  func.func @transform_1(%arg0: i32, %arg1: i32, %arg2: i32) -> (i32, i32) {
    %c0_i32 = arith.constant 0 : i32
    return %arg2, %arg1 : i32, i32
  }
  func.func @transform_2(%arg0: i32, %arg1: i32, %arg2: i32) -> (i32, i32) {
    %c0_i32 = arith.constant 0 : i32
    %c0_i32_0 = arith.constant 0 : i32
    return %c0_i32, %arg1 : i32, i32
  }
  func.func @transform_3(%arg0: i32, %arg1: i32, %arg2: i32) -> (i32, i32) {
    %c0_i32 = arith.constant 0 : i32
    return %arg0, %arg1 : i32, i32
  }
}

module attributes {stable_mosaic.version = 11 : i64} {
  func.func @_matmul_bias_kernel(%arg0: i32, %arg1: i32, %arg2: i32, %arg3: memref<256x256xbf16, #tpu.memory_space<vmem>>, %arg4: memref<256x128xbf16, #tpu.memory_space<vmem>>, %arg5: memref<1x128xf32, #tpu.memory_space<vmem>>, %arg6: memref<256x128xbf16, #tpu.memory_space<vmem>>, %arg7: memref<256x128xf32, #tpu.memory_space<vmem>>) attributes {dimension_semantics = [#tpu.dimension_semantics<parallel>, #tpu.dimension_semantics<parallel>, #tpu.dimension_semantics<arbitrary>], iteration_bounds = array<i64: 1, 1, 1>, scalar_prefetch = 0 : i64, scratch_operands = 1 : i64, tpu.core_type = #tpu.core_type<tc>, window_params = [{transform_indices = @transform_0, window_bounds = array<i64: 256, 256>}, {transform_indices = @transform_1, window_bounds = array<i64: 256, 128>}, {transform_indices = @transform_2, window_bounds = array<i64: 1, 128>}, {transform_indices = @transform_3, window_bounds = array<i64: 256, 128>}]} {
    %c0_i32 = arith.constant 0 : i32
    %0 = arith.cmpi eq, %arg2, %c0_i32 : i32
    %1 = arith.extui %0 : i1 to i32
    %c0_i32_0 = arith.constant 0 : i32
    %2 = arith.cmpi ne, %1, %c0_i32_0 : i32
    scf.if %2 {
      %cst_10 = arith.constant 0.000000e+00 : f32
      %12 = vector.broadcast %cst_10 : f32 to vector<256x128xf32>
      %c0_11 = arith.constant 0 : index
      %c0_12 = arith.constant 0 : index
      %13 = vector.load %arg7[%c0_11, %c0_12] : memref<256x128xf32, #tpu.memory_space<vmem>>, vector<256x128xf32>
      tpu.vector_store %arg7[%c0_11, %c0_12], %12 {strides = array<i32>} : memref<256x128xf32, #tpu.memory_space<vmem>>, vector<256x128xf32>,
    } else {
    }
    %c0 = arith.constant 0 : index
    %c0_1 = arith.constant 0 : index
    %3 = vector.load %arg7[%c0, %c0_1] : memref<256x128xf32, #tpu.memory_space<vmem>>, vector<256x128xf32>
    %c0_2 = arith.constant 0 : index
    %c0_3 = arith.constant 0 : index
    %4 = vector.load %arg3[%c0_2, %c0_3] : memref<256x256xbf16, #tpu.memory_space<vmem>>, vector<256x256xbf16>
    %c0_4 = arith.constant 0 : index
    %c0_5 = arith.constant 0 : index
    %5 = vector.load %arg4[%c0_4, %c0_5] : memref<256x128xbf16, #tpu.memory_space<vmem>>, vector<256x128xbf16>
    %cst = arith.constant dense<0.000000e+00> : vector<256x128xf32>
    %6 = tpu.matmul %4, %5, %cst {dimension_numbers = #tpu.dot_dimension_numbers<[1], [0], [0], [1], [0, 0, 1, 1], [], []>} : vector<256x256xbf16>, vector<256x128xbf16>, vector<256x128xf32> -> vector<256x128xf32>
    %7 = arith.addf %3, %6 : vector<256x128xf32>
    %c0_6 = arith.constant 0 : index
    %c0_7 = arith.constant 0 : index
    %8 = vector.load %arg7[%c0_6, %c0_7] : memref<256x128xf32, #tpu.memory_space<vmem>>, vector<256x128xf32>
    tpu.vector_store %arg7[%c0_6, %c0_7], %7 {strides = array<i32>} : memref<256x128xf32, #tpu.memory_space<vmem>>, vector<256x128xf32>,
    %c0_i32_8 = arith.constant 0 : i32
    %9 = arith.cmpi eq, %arg2, %c0_i32_8 : i32
    %10 = arith.extui %9 : i1 to i32
    %c0_i32_9 = arith.constant 0 : i32
    %11 = arith.cmpi ne, %10, %c0_i32_9 : i32
    scf.if %11 {
      %c0_10 = arith.constant 0 : index
      %c0_11 = arith.constant 0 : index
      %12 = vector.load %arg7[%c0_10, %c0_11] : memref<256x128xf32, #tpu.memory_space<vmem>>, vector<256x128xf32>
      %13 = arith.truncf %12 : vector<256x128xf32> to vector<256x128xbf16>
      %c0_12 = arith.constant 0 : index
      %c0_13 = arith.constant 0 : index
      %14 = vector.load %arg6[%c0_12, %c0_13] : memref<256x128xbf16, #tpu.memory_space<vmem>>, vector<256x128xbf16>
      tpu.vector_store %arg6[%c0_12, %c0_13], %13 {strides = array<i32>} : memref<256x128xbf16, #tpu.memory_space<vmem>>, vector<256x128xbf16>,
    } else {
    }
    return
  }
  func.func @transform_0(%arg0: i32, %arg1: i32, %arg2: i32) -> (i32, i32) {
    %c0_i32 = arith.constant 0 : i32
    return %arg0, %arg2 : i32, i32
  }
  func.func @transform_1(%arg0: i32, %arg1: i32, %arg2: i32) -> (i32, i32) {
    %c0_i32 = arith.constant 0 : i32
    return %arg2, %arg1 : i32, i32
  }
  func.func @transform_2(%arg0: i32, %arg1: i32, %arg2: i32) -> (i32, i32) {
    %c0_i32 = arith.constant 0 : i32
    %c0_i32_0 = arith.constant 0 : i32
    return %c0_i32, %arg1 : i32, i32
  }
  func.func @transform_3(%arg0: i32, %arg1: i32, %arg2: i32) -> (i32, i32) {
    %c0_i32 = arith.constant 0 : i32
    return %arg0, %arg1 : i32, i32
  }
}

module attributes {stable_mosaic.version = 11 : i64} {
  func.func @_matmul_bias_kernel(%arg0: i32, %arg1: i32, %arg2: i32, %arg3: memref<256x256xbf16, #tpu.memory_space<vmem>>, %arg4: memref<256x128xbf16, #tpu.memory_space<vmem>>, %arg5: memref<1x128xf32, #tpu.memory_space<vmem>>, %arg6: memref<256x128xf32, #tpu.memory_space<vmem>>, %arg7: memref<256x128xf32, #tpu.memory_space<vmem>>) attributes {dimension_semantics = [#tpu.dimension_semantics<parallel>, #tpu.dimension_semantics<parallel>, #tpu.dimension_semantics<arbitrary>], iteration_bounds = array<i64: 1, 1, 1>, scalar_prefetch = 0 : i64, scratch_operands = 1 : i64, tpu.core_type = #tpu.core_type<tc>, window_params = [{transform_indices = @transform_0, window_bounds = array<i64: 256, 256>}, {transform_indices = @transform_1, window_bounds = array<i64: 256, 128>}, {transform_indices = @transform_2, window_bounds = array<i64: 1, 128>}, {transform_indices = @transform_3, window_bounds = array<i64: 256, 128>}]} {
    %c0_i32 = arith.constant 0 : i32
    %0 = arith.cmpi eq, %arg2, %c0_i32 : i32
    %1 = arith.extui %0 : i1 to i32
    %c0_i32_0 = arith.constant 0 : i32
    %2 = arith.cmpi ne, %1, %c0_i32_0 : i32
    scf.if %2 {
      %cst_10 = arith.constant 0.000000e+00 : f32
      %12 = vector.broadcast %cst_10 : f32 to vector<256x128xf32>
      %c0_11 = arith.constant 0 : index
      %c0_12 = arith.constant 0 : index
      %13 = vector.load %arg7[%c0_11, %c0_12] : memref<256x128xf32, #tpu.memory_space<vmem>>, vector<256x128xf32>
      tpu.vector_store %arg7[%c0_11, %c0_12], %12 {strides = array<i32>} : memref<256x128xf32, #tpu.memory_space<vmem>>, vector<256x128xf32>,
    } else {
    }
    %c0 = arith.constant 0 : index
    %c0_1 = arith.constant 0 : index
    %3 = vector.load %arg7[%c0, %c0_1] : memref<256x128xf32, #tpu.memory_space<vmem>>, vector<256x128xf32>
    %c0_2 = arith.constant 0 : index
    %c0_3 = arith.constant 0 : index
    %4 = vector.load %arg3[%c0_2, %c0_3] : memref<256x256xbf16, #tpu.memory_space<vmem>>, vector<256x256xbf16>
    %c0_4 = arith.constant 0 : index
    %c0_5 = arith.constant 0 : index
    %5 = vector.load %arg4[%c0_4, %c0_5] : memref<256x128xbf16, #tpu.memory_space<vmem>>, vector<256x128xbf16>
    %cst = arith.constant dense<0.000000e+00> : vector<256x128xf32>
    %6 = tpu.matmul %4, %5, %cst {dimension_numbers = #tpu.dot_dimension_numbers<[1], [0], [0], [1], [0, 0, 1, 1], [], []>} : vector<256x256xbf16>, vector<256x128xbf16>, vector<256x128xf32> -> vector<256x128xf32>
    %7 = arith.addf %3, %6 : vector<256x128xf32>
    %c0_6 = arith.constant 0 : index
    %c0_7 = arith.constant 0 : index
    %8 = vector.load %arg7[%c0_6, %c0_7] : memref<256x128xf32, #tpu.memory_space<vmem>>, vector<256x128xf32>
    tpu.vector_store %arg7[%c0_6, %c0_7], %7 {strides = array<i32>} : memref<256x128xf32, #tpu.memory_space<vmem>>, vector<256x128xf32>,
    %c0_i32_8 = arith.constant 0 : i32
    %9 = arith.cmpi eq, %arg2, %c0_i32_8 : i32
    %10 = arith.extui %9 : i1 to i32
    %c0_i32_9 = arith.constant 0 : i32
    %11 = arith.cmpi ne, %10, %c0_i32_9 : i32
    scf.if %11 {
      %c0_10 = arith.constant 0 : index
      %c0_11 = arith.constant 0 : index
      %12 = vector.load %arg7[%c0_10, %c0_11] : memref<256x128xf32, #tpu.memory_space<vmem>>, vector<256x128xf32>
      %c0_12 = arith.constant 0 : index
      %c0_13 = arith.constant 0 : index
      %13 = vector.load %arg5[%c0_12, %c0_13] : memref<1x128xf32, #tpu.memory_space<vmem>>, vector<1x128xf32>
      %14 = vector.broadcast %13 : vector<1x128xf32> to vector<256x128xf32>
      %15 = arith.addf %12, %14 : vector<256x128xf32>
      %c0_14 = arith.constant 0 : index
      %c0_15 = arith.constant 0 : index
      %16 = vector.load %arg6[%c0_14, %c0_15] : memref<256x128xf32, #tpu.memory_space<vmem>>, vector<256x128xf32>
      tpu.vector_store %arg6[%c0_14, %c0_15], %15 {strides = array<i32>} : memref<256x128xf32, #tpu.memory_space<vmem>>, vector<256x128xf32>,
    } else {
    }
    return
  }
  func.func @transform_0(%arg0: i32, %arg1: i32, %arg2: i32) -> (i32, i32) {
    %c0_i32 = arith.constant 0 : i32
    return %arg0, %arg2 : i32, i32
  }
  func.func @transform_1(%arg0: i32, %arg1: i32, %arg2: i32) -> (i32, i32) {
    %c0_i32 = arith.constant 0 : i32
    return %arg2, %arg1 : i32, i32
  }
  func.func @transform_2(%arg0: i32, %arg1: i32, %arg2: i32) -> (i32, i32) {
    %c0_i32 = arith.constant 0 : i32
    %c0_i32_0 = arith.constant 0 : i32
    return %c0_i32, %arg1 : i32, i32
  }
  func.func @transform_3(%arg0: i32, %arg1: i32, %arg2: i32) -> (i32, i32) {
    %c0_i32 = arith.constant 0 : i32
    return %arg0, %arg1 : i32, i32
  }
}

</mosaic_0001>

<llo_original>
// kernel: sgc_forward.3
$region0: #{sgc_forward.3}
  #allocation0 [shape = 'u32[]', space=smem, size = 0x4, offset = 0x4, fixed_abs, tag = 'smem constant byte address 0x4 - core index']
  #allocation1 [shape = 'u32[144,128]{1,0:T(1,128)}', space=vmem, size = 0x12000, scoped, tag = 'internal scratch']
  #allocation2 [shape = 'f32[256,128]{1,0:T(8,128)}', space=vmem, size = 0x20000, scoped, tag = 'scratch operand']
  %s0 = inlined_call_operand.vmem [shape: bf16[256,128], index: 0, kind: input, shape index: {}]
  %s1 = inlined_call_operand.vmem [shape: bf16[128,128], index: 1, kind: input, shape index: {}]
  %s2 = inlined_call_operand.vmem [shape: f32[1,128], index: 2, kind: input, shape index: {}]
  %s3 = inlined_call_operand.vmem [shape: bf16[256,128], index: 3, kind: output, shape index: {}]
  %s4 = sld [smem:[#allocation0]]
  $region30: #{sgc_forward.3} parent=0
    _
  %s6 = ssub.s32 1, %s4
  %s7 = scalar_select 0, %s6, %s4
  // Predicated region
  $region2: #{sgc_forward.3} parent=0 // pred_check
    _
  $region3: #{sgc_forward.3} parent=0 // pred_check_branch
    %9 = sbr.rel (0) target = $region5
  $region4: #{sgc_forward.3} parent=0 // pred_region
    _
  $region5: #{sgc_forward.3} parent=0 // pred_fallthru
    _
  // Predicated region
  $region6: #{sgc_forward.3} parent=0 // pred_check
    _
  $region7: #{sgc_forward.3} parent=0 // pred_check_branch
    %11 = sbr.rel (0) target = $region9
  $region8: #{sgc_forward.3} parent=0 // pred_region
    _
  $region9: #{sgc_forward.3} parent=0 // pred_fallthru
    _
  // Predicated region
  $region10: #{sgc_forward.3} parent=0 // pred_check
    _
  $region11: #{sgc_forward.3} parent=0 // pred_check_branch
    %13 = sbr.rel (0) target = $region13
  $region12: #{sgc_forward.3} parent=0 // pred_region
    _
  $region13: #{sgc_forward.3} parent=0 // pred_fallthru
    _
  %p15 = scmp.eq.s32.totalorder 0, 0
  // Predicated region
  $region14: #{sgc_forward.3} parent=0 // pred_check
    %p16 = pneg %p15
  $region15: #{sgc_forward.3} parent=0 // pred_check_branch
    %18 = sbr.rel (%p16) target = $region17
  $region16: #{sgc_forward.3} parent=0 // pred_region
    %19 = vst [vmem:[#allocation2] sm:$0xff] 0.0
    %20 = vst [vmem:[#allocation2 + $0x8] sm:$0xff] 0.0
    %21 = vst [vmem:[#allocation2 + $0x10] sm:$0xff] 0.0
    %22 = vst [vmem:[#allocation2 + $0x18] sm:$0xff] 0.0
    %23 = vst [vmem:[#allocation2 + $0x20] sm:$0xff] 0.0
    %24 = vst [vmem:[#allocation2 + $0x28] sm:$0xff] 0.0
    %25 = vst [vmem:[#allocation2 + $0x30] sm:$0xff] 0.0
    %26 = vst [vmem:[#allocation2 + $0x38] sm:$0xff] 0.0
    %27 = vst [vmem:[#allocation2 + $0x40] sm:$0xff] 0.0
    %28 = vst [vmem:[#allocation2 + $0x48] sm:$0xff] 0.0
    %29 = vst [vmem:[#allocation2 + $0x50] sm:$0xff] 0.0
    %30 = vst [vmem:[#allocation2 + $0x58] sm:$0xff] 0.0
    %31 = vst [vmem:[#allocation2 + $0x60] sm:$0xff] 0.0
    %32 = vst [vmem:[#allocation2 + $0x68] sm:$0xff] 0.0
    %33 = vst [vmem:[#allocation2 + $0x70] sm:$0xff] 0.0
    %34 = vst [vmem:[#allocation2 + $0x78] sm:$0xff] 0.0
    %35 = vst [vmem:[#allocation2 + $0x80] sm:$0xff] 0.0
    %36 = vst [vmem:[#allocation2 + $0x88] sm:$0xff] 0.0
    %37 = vst [vmem:[#allocation2 + $0x90] sm:$0xff] 0.0
    %38 = vst [vmem:[#allocation2 + $0x98] sm:$0xff] 0.0
    %39 = vst [vmem:[#allocation2 + $0xa0] sm:$0xff] 0.0
    %40 = vst [vmem:[#allocation2 + $0xa8] sm:$0xff] 0.0
    %41 = vst [vmem:[#allocation2 + $0xb0] sm:$0xff] 0.0
    %42 = vst [vmem:[#allocation2 + $0xb8] sm:$0xff] 0.0
    %43 = vst [vmem:[#allocation2 + $0xc0] sm:$0xff] 0.0
    %44 = vst [vmem:[#allocation2 + $0xc8] sm:$0xff] 0.0
    %45 = vst [vmem:[#allocation2 + $0xd0] sm:$0xff] 0.0
    %46 = vst [vmem:[#allocation2 + $0xd8] sm:$0xff] 0.0
    %47 = vst [vmem:[#allocation2 + $0xe0] sm:$0xff] 0.0
    %48 = vst [vmem:[#allocation2 + $0xe8] sm:$0xff] 0.0
    %49 = vst [vmem:[#allocation2 + $0xf0] sm:$0xff] 0.0
    %50 = vst [vmem:[#allocation2 + $0xf8] sm:$0xff] 0.0
  $region17: #{sgc_forward.3} parent=0 // pred_fallthru
    _
  %v51 = vld [vmem:[#allocation2] sm:$0xff]
  %v52 = vld [vmem:[#allocation2 + $0x8] sm:$0xff]
  %v53 = vld [vmem:[#allocation2 + $0x10] sm:$0xff]
  %v54 = vld [vmem:[#allocation2 + $0x18] sm:$0xff]
  %v55 = vld [vmem:[#allocation2 + $0x20] sm:$0xff]
  %v56 = vld [vmem:[#allocation2 + $0x28] sm:$0xff]
  %v57 = vld [vmem:[#allocation2 + $0x30] sm:$0xff]
  %v58 = vld [vmem:[#allocation2 + $0x38] sm:$0xff]
  %v59 = vld [vmem:[#allocation2 + $0x40] sm:$0xff]
  %v60 = vld [vmem:[#allocation2 + $0x48] sm:$0xff]
  %v61 = vld [vmem:[#allocation2 + $0x50] sm:$0xff]
  %v62 = vld [vmem:[#allocation2 + $0x58] sm:$0xff]
  %v63 = vld [vmem:[#allocation2 + $0x60] sm:$0xff]
  %v64 = vld [vmem:[#allocation2 + $0x68] sm:$0xff]
  %v65 = vld [vmem:[#allocation2 + $0x70] sm:$0xff]
  %v66 = vld [vmem:[#allocation2 + $0x78] sm:$0xff]
  %v67 = vld [vmem:[#allocation2 + $0x80] sm:$0xff]
  %v68 = vld [vmem:[#allocation2 + $0x88] sm:$0xff]
  %v69 = vld [vmem:[#allocation2 + $0x90] sm:$0xff]
  %v70 = vld [vmem:[#allocation2 + $0x98] sm:$0xff]
  %v71 = vld [vmem:[#allocation2 + $0xa0] sm:$0xff]
  %v72 = vld [vmem:[#allocation2 + $0xa8] sm:$0xff]
  %v73 = vld [vmem:[#allocation2 + $0xb0] sm:$0xff]
  %v74 = vld [vmem:[#allocation2 + $0xb8] sm:$0xff]
  %v75 = vld [vmem:[#allocation2 + $0xc0] sm:$0xff]
  %v76 = vld [vmem:[#allocation2 + $0xc8] sm:$0xff]
  %v77 = vld [vmem:[#allocation2 + $0xd0] sm:$0xff]
  %v78 = vld [vmem:[#allocation2 + $0xd8] sm:$0xff]
  %v79 = vld [vmem:[#allocation2 + $0xe0] sm:$0xff]
  %v80 = vld [vmem:[#allocation2 + $0xe8] sm:$0xff]
  %v81 = vld [vmem:[#allocation2 + $0xf0] sm:$0xff]
  %v82 = vld [vmem:[#allocation2 + $0xf8] sm:$0xff]
  %v83 = vld [vmem:[%s0] sm:$0xf]
  %v84 = vld [vmem:[%s0 + $0x4] sm:$0xf]
  %v85 = vld [vmem:[%s0 + $0x8] sm:$0xf]
  %v86 = vld [vmem:[%s0 + $0xc] sm:$0xf]
  %v87 = vld [vmem:[%s0 + $0x10] sm:$0xf]
  %v88 = vld [vmem:[%s0 + $0x14] sm:$0xf]
  %v89 = vld [vmem:[%s0 + $0x18] sm:$0xf]
  %v90 = vld [vmem:[%s0 + $0x1c] sm:$0xf]
  %v91 = vld [vmem:[%s0 + $0x20] sm:$0xf]
  %v92 = vld [vmem:[%s0 + $0x24] sm:$0xf]
  %v93 = vld [vmem:[%s0 + $0x28] sm:$0xf]
  %v94 = vld [vmem:[%s0 + $0x2c] sm:$0xf]
  %v95 = vld [vmem:[%s0 + $0x30] sm:$0xf]
  %v96 = vld [vmem:[%s0 + $0x34] sm:$0xf]
  %v97 = vld [vmem:[%s0 + $0x38] sm:$0xf]
  %v98 = vld [vmem:[%s0 + $0x3c] sm:$0xf]
  %v99 = vld [vmem:[%s0 + $0x40] sm:$0xf]
  %v100 = vld [vmem:[%s0 + $0x44] sm:$0xf]
  %v101 = vld [vmem:[%s0 + $0x48] sm:$0xf]
  %v102 = vld [vmem:[%s0 + $0x4c] sm:$0xf]
  %v103 = vld [vmem:[%s0 + $0x50] sm:$0xf]
  %v104 = vld [vmem:[%s0 + $0x54] sm:$0xf]
  %v105 = vld [vmem:[%s0 + $0x58] sm:$0xf]
  %v106 = vld [vmem:[%s0 + $0x5c] sm:$0xf]
  %v107 = vld [vmem:[%s0 + $0x60] sm:$0xf]
  %v108 = vld [vmem:[%s0 + $0x64] sm:$0xf]
  %v109 = vld [vmem:[%s0 + $0x68] sm:$0xf]
  %v110 = vld [vmem:[%s0 + $0x6c] sm:$0xf]
  %v111 = vld [vmem:[%s0 + $0x70] sm:$0xf]
  %v112 = vld [vmem:[%s0 + $0x74] sm:$0xf]
  %v113 = vld [vmem:[%s0 + $0x78] sm:$0xf]
  %v114 = vld [vmem:[%s0 + $0x7c] sm:$0xf]
  %v115 = vld [vmem:[%s1] sm:$0xf]
  %v116 = vld [vmem:[%s1 + $0x4] sm:$0xf]
  %v117 = vld [vmem:[%s1 + $0x8] sm:$0xf]
  %v118 = vld [vmem:[%s1 + $0xc] sm:$0xf]
  %v119 = vld [vmem:[%s1 + $0x10] sm:$0xf]
  %v120 = vld [vmem:[%s1 + $0x14] sm:$0xf]
  %v121 = vld [vmem:[%s1 + $0x18] sm:$0xf]
  %v122 = vld [vmem:[%s1 + $0x1c] sm:$0xf]
  %v123 = vld [vmem:[%s1 + $0x20] sm:$0xf]
  %v124 = vld [vmem:[%s1 + $0x24] sm:$0xf]
  %v125 = vld [vmem:[%s1 + $0x28] sm:$0xf]
  %v126 = vld [vmem:[%s1 + $0x2c] sm:$0xf]
  %v127 = vld [vmem:[%s1 + $0x30] sm:$0xf]
  %v128 = vld [vmem:[%s1 + $0x34] sm:$0xf]
  %v129 = vld [vmem:[%s1 + $0x38] sm:$0xf]
  %v130 = vld [vmem:[%s1 + $0x3c] sm:$0xf]
  %v163 = vunpack.c.l.b16 %v83
  %v164 = vunpack.c.l.b16 %v84
  %v165 = vunpack.c.l.b16 %v85
  %v166 = vunpack.c.l.b16 %v86
  %v167 = vunpack.c.l.b16 %v87
  %v168 = vunpack.c.l.b16 %v88
  %v169 = vunpack.c.l.b16 %v89
  %v170 = vunpack.c.l.b16 %v90
  %v171 = vunpack.c.l.b16 %v91
  %v172 = vunpack.c.l.b16 %v92
  %v173 = vunpack.c.l.b16 %v93
  %v174 = vunpack.c.l.b16 %v94
  %v175 = vunpack.c.l.b16 %v95
  %v176 = vunpack.c.l.b16 %v96
  %v177 = vunpack.c.l.b16 %v97
  %v178 = vunpack.c.l.b16 %v98
  %v179 = vunpack.c.l.b16 %v99
  %v180 = vunpack.c.l.b16 %v100
  %v181 = vunpack.c.l.b16 %v101
  %v182 = vunpack.c.l.b16 %v102
  %v183 = vunpack.c.l.b16 %v103
  %v184 = vunpack.c.l.b16 %v104
  %v185 = vunpack.c.l.b16 %v105
  %v186 = vunpack.c.l.b16 %v106
  %v187 = vunpack.c.l.b16 %v107
  %v188 = vunpack.c.l.b16 %v108
  %v189 = vunpack.c.l.b16 %v109
  %v190 = vunpack.c.l.b16 %v110
  %v191 = vunpack.c.l.b16 %v111
  %v192 = vunpack.c.l.b16 %v112
  %v193 = vunpack.c.l.b16 %v113
  %v194 = vunpack.c.l.b16 %v114
  %v195 = vpack.c.b16 %v164, %v163
  %v196 = vpack.c.b16 %v166, %v165
  %v197 = vpack.c.b16 %v168, %v167
  %v198 = vpack.c.b16 %v170, %v169
  %v199 = vpack.c.b16 %v172, %v171
  %v200 = vpack.c.b16 %v174, %v173
  %v201 = vpack.c.b16 %v176, %v175
  %v202 = vpack.c.b16 %v178, %v177
  %v203 = vpack.c.b16 %v180, %v179
  %v204 = vpack.c.b16 %v182, %v181
  %v205 = vpack.c.b16 %v184, %v183
  %v206 = vpack.c.b16 %v186, %v185
  %v207 = vpack.c.b16 %v188, %v187
  %v208 = vpack.c.b16 %v190, %v189
  %v209 = vpack.c.b16 %v192, %v191
  %v210 = vpack.c.b16 %v194, %v193
  %v243 = vunpack.c.l.b16 %v115
  %v244 = vunpack.c.l.b16 %v116
  %v245 = vunpack.c.l.b16 %v117
  %v246 = vunpack.c.l.b16 %v118
  %v247 = vunpack.c.l.b16 %v119
  %v248 = vunpack.c.l.b16 %v120
  %v249 = vunpack.c.l.b16 %v121
  %v250 = vunpack.c.l.b16 %v122
  %v251 = vunpack.c.l.b16 %v123
  %v252 = vunpack.c.l.b16 %v124
  %v253 = vunpack.c.l.b16 %v125
  %v254 = vunpack.c.l.b16 %v126
  %v255 = vunpack.c.l.b16 %v127
  %v256 = vunpack.c.l.b16 %v128
  %v257 = vunpack.c.l.b16 %v129
  %v258 = vunpack.c.l.b16 %v130
  %v259 = vpack.c.b16 %v244, %v243
  %v260 = vpack.c.b16 %v246, %v245
  %v261 = vpack.c.b16 %v248, %v247
  %v262 = vpack.c.b16 %v250, %v249
  %v263 = vpack.c.b16 %v252, %v251
  %v264 = vpack.c.b16 %v254, %v253
  %v265 = vpack.c.b16 %v256, %v255
  %v266 = vpack.c.b16 %v258, %v257
  %275 = vmatprep.subr.bf16.mxu0 0
  %276 = vmatpush1.bf16.msra.mxu0 %v259
  %277 = vmatprep.subr.bf16.mxu0 0
  %278 = vmatpush1.bf16.msra.mxu0 %v260
  %279 = vmatprep.subr.bf16.mxu0 0
  %280 = vmatpush1.bf16.msra.mxu0 %v261
  %281 = vmatprep.subr.bf16.mxu0 0
  %282 = vmatpush1.bf16.msra.mxu0 %v262
  %283 = vmatprep.subr.bf16.mxu0 0
  %284 = vmatpush1.bf16.msra.mxu0 %v263
  %285 = vmatprep.subr.bf16.mxu0 0
  %286 = vmatpush1.bf16.msra.mxu0 %v264
  %287 = vmatprep.subr.bf16.mxu0 0
  %288 = vmatpush1.bf16.msra.mxu0 %v265
  %289 = vmatprep.subr.bf16.mxu0 0
  %290 = vmatpush1.bf16.msra.mxu0 %v266
  %291 = vmatprep.subr.bf16.mxu0 0
  %292 = vmatpush1.bf16.msra.mxu0 0
  %293 = vmatprep.subr.bf16.mxu0 0
  %294 = vmatpush1.bf16.msra.mxu0 0
  %295 = vmatprep.subr.bf16.mxu0 0
  %296 = vmatpush1.bf16.msra.mxu0 0
  %297 = vmatprep.subr.bf16.mxu0 0
  %298 = vmatpush1.bf16.msra.mxu0 0
  %299 = vmatprep.subr.bf16.mxu0 0
  %300 = vmatpush1.bf16.msra.mxu0 0
  %301 = vmatprep.subr.bf16.mxu0 0
  %302 = vmatpush1.bf16.msra.mxu0 0
  %303 = vmatprep.subr.bf16.mxu0 0
  %304 = vmatpush1.bf16.msra.mxu0 0
  %305 = vmatprep.subr.bf16.mxu0 0
  %306 = vmatpush1.bf16.msra.mxu0 0
  %307 = vmatprep.mubr.bf16.mxu0 0
  %308 = vmatmul.mubr.bf16.gmra.mrb[0].mxu0 %v195
  %v309 = vpop.f32.mrb[0].mxu0
  %v310 = vadd.f32 0.0, %v309
  %v311 = vpop.f32.mrb[0].mxu0
  %v312 = vpop.f32.mrb[0].mxu0
  %v313 = vadd.f32 0.0, %v312
  %v314 = vpop.f32.mrb[0].mxu0
  %315 = vmatprep.mubr.bf16.mxu0 0
  %316 = vmatmul.mubr.bf16.gmra.mrb[0].mxu0 %v196
  %v317 = vpop.f32.mrb[0].mxu0
  %v318 = vadd.f32 0.0, %v317
  %v319 = vpop.f32.mrb[0].mxu0
  %v320 = vpop.f32.mrb[0].mxu0
  %v321 = vadd.f32 0.0, %v320
  %v322 = vpop.f32.mrb[0].mxu0
  %323 = vmatprep.mubr.bf16.mxu0 0
  %324 = vmatmul.mubr.bf16.gmra.mrb[0].mxu0 %v197
  %v325 = vpop.f32.mrb[0].mxu0
  %v326 = vadd.f32 0.0, %v325
  %v327 = vpop.f32.mrb[0].mxu0
  %v328 = vpop.f32.mrb[0].mxu0
  %v329 = vadd.f32 0.0, %v328
  %v330 = vpop.f32.mrb[0].mxu0
  %331 = vmatprep.mubr.bf16.mxu0 0
  %332 = vmatmul.mubr.bf16.gmra.mrb[0].mxu0 %v198
  %v333 = vpop.f32.mrb[0].mxu0
  %v334 = vadd.f32 0.0, %v333
  %v335 = vpop.f32.mrb[0].mxu0
  %v336 = vpop.f32.mrb[0].mxu0
  %v337 = vadd.f32 0.0, %v336
  %v338 = vpop.f32.mrb[0].mxu0
  %339 = vmatprep.mubr.bf16.mxu0 0
  %340 = vmatmul.mubr.bf16.gmra.mrb[0].mxu0 %v199
  %v341 = vpop.f32.mrb[0].mxu0
  %v342 = vadd.f32 0.0, %v341
  %v343 = vpop.f32.mrb[0].mxu0
  %v344 = vpop.f32.mrb[0].mxu0
  %v345 = vadd.f32 0.0, %v344
  %v346 = vpop.f32.mrb[0].mxu0
  %347 = vmatprep.mubr.bf16.mxu0 0
  %348 = vmatmul.mubr.bf16.gmra.mrb[0].mxu0 %v200
  %v349 = vpop.f32.mrb[0].mxu0
  %v350 = vadd.f32 0.0, %v349
  %v351 = vpop.f32.mrb[0].mxu0
  %v352 = vpop.f32.mrb[0].mxu0
  %v353 = vadd.f32 0.0, %v352
  %v354 = vpop.f32.mrb[0].mxu0
  %355 = vmatprep.mubr.bf16.mxu0 0
  %356 = vmatmul.mubr.bf16.gmra.mrb[0].mxu0 %v201
  %v357 = vpop.f32.mrb[0].mxu0
  %v358 = vadd.f32 0.0, %v357
  %v359 = vpop.f32.mrb[0].mxu0
  %v360 = vpop.f32.mrb[0].mxu0
  %v361 = vadd.f32 0.0, %v360
  %v362 = vpop.f32.mrb[0].mxu0
  %363 = vmatprep.mubr.bf16.mxu0 0
  %364 = vmatmul.mubr.bf16.gmra.mrb[0].mxu0 %v202
  %v365 = vpop.f32.mrb[0].mxu0
  %v366 = vadd.f32 0.0, %v365
  %v367 = vpop.f32.mrb[0].mxu0
  %v368 = vpop.f32.mrb[0].mxu0
  %v369 = vadd.f32 0.0, %v368
  %v370 = vpop.f32.mrb[0].mxu0
  %371 = vmatprep.mubr.bf16.mxu0 0
  %372 = vmatmul.mubr.bf16.gmra.mrb[0].mxu0 %v203
  %v373 = vpop.f32.mrb[0].mxu0
  %v374 = vadd.f32 0.0, %v373
  %v375 = vpop.f32.mrb[0].mxu0
  %v376 = vpop.f32.mrb[0].mxu0
  %v377 = vadd.f32 0.0, %v376
  %v378 = vpop.f32.mrb[0].mxu0
  %379 = vmatprep.mubr.bf16.mxu0 0
  %380 = vmatmul.mubr.bf16.gmra.mrb[0].mxu0 %v204
  %v381 = vpop.f32.mrb[0].mxu0
  %v382 = vadd.f32 0.0, %v381
  %v383 = vpop.f32.mrb[0].mxu0
  %v384 = vpop.f32.mrb[0].mxu0
  %v385 = vadd.f32 0.0, %v384
  %v386 = vpop.f32.mrb[0].mxu0
  %387 = vmatprep.mubr.bf16.mxu0 0
  %388 = vmatmul.mubr.bf16.gmra.mrb[0].mxu0 %v205
  %v389 = vpop.f32.mrb[0].mxu0
  %v390 = vadd.f32 0.0, %v389
  %v391 = vpop.f32.mrb[0].mxu0
  %v392 = vpop.f32.mrb[0].mxu0
  %v393 = vadd.f32 0.0, %v392
  %v394 = vpop.f32.mrb[0].mxu0
  %395 = vmatprep.mubr.bf16.mxu0 0
  %396 = vmatmul.mubr.bf16.gmra.mrb[0].mxu0 %v206
  %v397 = vpop.f32.mrb[0].mxu0
  %v398 = vadd.f32 0.0, %v397
  %v399 = vpop.f32.mrb[0].mxu0
  %v400 = vpop.f32.mrb[0].mxu0
  %v401 = vadd.f32 0.0, %v400
  %v402 = vpop.f32.mrb[0].mxu0
  %403 = vmatprep.mubr.bf16.mxu0 0
  %404 = vmatmul.mubr.bf16.gmra.mrb[0].mxu0 %v207
  %v405 = vpop.f32.mrb[0].mxu0
  %v406 = vadd.f32 0.0, %v405
  %v407 = vpop.f32.mrb[0].mxu0
  %v408 = vpop.f32.mrb[0].mxu0
  %v409 = vadd.f32 0.0, %v408
  %v410 = vpop.f32.mrb[0].mxu0
  %411 = vmatprep.mubr.bf16.mxu0 0
  %412 = vmatmul.mubr.bf16.gmra.mrb[0].mxu0 %v208
  %v413 = vpop.f32.mrb[0].mxu0
  %v414 = vadd.f32 0.0, %v413
  %v415 = vpop.f32.mrb[0].mxu0
  %v416 = vpop.f32.mrb[0].mxu0
  %v417 = vadd.f32 0.0, %v416
  %v418 = vpop.f32.mrb[0].mxu0
  %419 = vmatprep.mubr.bf16.mxu0 0
  %420 = vmatmul.mubr.bf16.gmra.mrb[0].mxu0 %v209
  %v421 = vpop.f32.mrb[0].mxu0
  %v422 = vadd.f32 0.0, %v421
  %v423 = vpop.f32.mrb[0].mxu0
  %v424 = vpop.f32.mrb[0].mxu0
  %v425 = vadd.f32 0.0, %v424
  %v426 = vpop.f32.mrb[0].mxu0
  %427 = vmatprep.mubr.bf16.mxu0 0
  %428 = vmatmul.mubr.bf16.gmra.mrb[0].mxu0 %v210
  %v429 = vpop.f32.mrb[0].mxu0
  %v430 = vadd.f32 0.0, %v429
  %v431 = vpop.f32.mrb[0].mxu0
  %v432 = vpop.f32.mrb[0].mxu0
  %v433 = vadd.f32 0.0, %v432
  %v434 = vpop.f32.mrb[0].mxu0
  %435 = vdwg.mxu0
  %v436 = vadd.f32 %v51, %v310
  %v437 = vadd.f32 %v52, %v313
  %v438 = vadd.f32 %v53, %v318
  %v439 = vadd.f32 %v54, %v321
  %v440 = vadd.f32 %v55, %v326
  %v441 = vadd.f32 %v56, %v329
  %v442 = vadd.f32 %v57, %v334
  %v443 = vadd.f32 %v58, %v337
  %v444 = vadd.f32 %v59, %v342
  %v445 = vadd.f32 %v60, %v345
  %v446 = vadd.f32 %v61, %v350
  %v447 = vadd.f32 %v62, %v353
  %v448 = vadd.f32 %v63, %v358
  %v449 = vadd.f32 %v64, %v361
  %v450 = vadd.f32 %v65, %v366
  %v451 = vadd.f32 %v66, %v369
  %v452 = vadd.f32 %v67, %v374
  %v453 = vadd.f32 %v68, %v377
  %v454 = vadd.f32 %v69, %v382
  %v455 = vadd.f32 %v70, %v385
  %v456 = vadd.f32 %v71, %v390
  %v457 = vadd.f32 %v72, %v393
  %v458 = vadd.f32 %v73, %v398
  %v459 = vadd.f32 %v74, %v401
  %v460 = vadd.f32 %v75, %v406
  %v461 = vadd.f32 %v76, %v409
  %v462 = vadd.f32 %v77, %v414
  %v463 = vadd.f32 %v78, %v417
  %v464 = vadd.f32 %v79, %v422
  %v465 = vadd.f32 %v80, %v425
  %v466 = vadd.f32 %v81, %v430
  %v467 = vadd.f32 %v82, %v433
  %468 = vst [vmem:[#allocation2] sm:$0xff] %v436
  %469 = vst [vmem:[#allocation2 + $0x8] sm:$0xff] %v437
  %470 = vst [vmem:[#allocation2 + $0x10] sm:$0xff] %v438
  %471 = vst [vmem:[#allocation2 + $0x18] sm:$0xff] %v439
  %472 = vst [vmem:[#allocation2 + $0x20] sm:$0xff] %v440
  %473 = vst [vmem:[#allocation2 + $0x28] sm:$0xff] %v441
  %474 = vst [vmem:[#allocation2 + $0x30] sm:$0xff] %v442
  %475 = vst [vmem:[#allocation2 + $0x38] sm:$0xff] %v443
  %476 = vst [vmem:[#allocation2 + $0x40] sm:$0xff] %v444
  %477 = vst [vmem:[#allocation2 + $0x48] sm:$0xff] %v445
  %478 = vst [vmem:[#allocation2 + $0x50] sm:$0xff] %v446
  %479 = vst [vmem:[#allocation2 + $0x58] sm:$0xff] %v447
  %480 = vst [vmem:[#allocation2 + $0x60] sm:$0xff] %v448
  %481 = vst [vmem:[#allocation2 + $0x68] sm:$0xff] %v449
  %482 = vst [vmem:[#allocation2 + $0x70] sm:$0xff] %v450
  %483 = vst [vmem:[#allocation2 + $0x78] sm:$0xff] %v451
  %484 = vst [vmem:[#allocation2 + $0x80] sm:$0xff] %v452
  %485 = vst [vmem:[#allocation2 + $0x88] sm:$0xff] %v453
  %486 = vst [vmem:[#allocation2 + $0x90] sm:$0xff] %v454
  %487 = vst [vmem:[#allocation2 + $0x98] sm:$0xff] %v455
  %488 = vst [vmem:[#allocation2 + $0xa0] sm:$0xff] %v456
  %489 = vst [vmem:[#allocation2 + $0xa8] sm:$0xff] %v457
  %490 = vst [vmem:[#allocation2 + $0xb0] sm:$0xff] %v458
  %491 = vst [vmem:[#allocation2 + $0xb8] sm:$0xff] %v459
  %492 = vst [vmem:[#allocation2 + $0xc0] sm:$0xff] %v460
  %493 = vst [vmem:[#allocation2 + $0xc8] sm:$0xff] %v461
  %494 = vst [vmem:[#allocation2 + $0xd0] sm:$0xff] %v462
  %495 = vst [vmem:[#allocation2 + $0xd8] sm:$0xff] %v463
  %496 = vst [vmem:[#allocation2 + $0xe0] sm:$0xff] %v464
  %497 = vst [vmem:[#allocation2 + $0xe8] sm:$0xff] %v465
  %498 = vst [vmem:[#allocation2 + $0xf0] sm:$0xff] %v466
  %499 = vst [vmem:[#allocation2 + $0xf8] sm:$0xff] %v467
  // Predicated region
  $region18: #{sgc_forward.3} parent=0 // pred_check
    %p500 = pneg %p15
  $region19: #{sgc_forward.3} parent=0 // pred_check_branch
    %502 = sbr.rel (%p500) target = $region21
  $region20: #{sgc_forward.3} parent=0 // pred_region
    %v503 = vld [vmem:[#allocation2] sm:$0xff]
    %v504 = vld [vmem:[#allocation2 + $0x8] sm:$0xff]
    %v505 = vld [vmem:[#allocation2 + $0x10] sm:$0xff]
    %v506 = vld [vmem:[#allocation2 + $0x18] sm:$0xff]
    %v507 = vld [vmem:[#allocation2 + $0x20] sm:$0xff]
    %v508 = vld [vmem:[#allocation2 + $0x28] sm:$0xff]
    %v509 = vld [vmem:[#allocation2 + $0x30] sm:$0xff]
    %v510 = vld [vmem:[#allocation2 + $0x38] sm:$0xff]
    %v511 = vld [vmem:[#allocation2 + $0x40] sm:$0xff]
    %v512 = vld [vmem:[#allocation2 + $0x48] sm:$0xff]
    %v513 = vld [vmem:[#allocation2 + $0x50] sm:$0xff]
    %v514 = vld [vmem:[#allocation2 + $0x58] sm:$0xff]
    %v515 = vld [vmem:[#allocation2 + $0x60] sm:$0xff]
    %v516 = vld [vmem:[#allocation2 + $0x68] sm:$0xff]
    %v517 = vld [vmem:[#allocation2 + $0x70] sm:$0xff]
    %v518 = vld [vmem:[#allocation2 + $0x78] sm:$0xff]
    %v519 = vld [vmem:[#allocation2 + $0x80] sm:$0xff]
    %v520 = vld [vmem:[#allocation2 + $0x88] sm:$0xff]
    %v521 = vld [vmem:[#allocation2 + $0x90] sm:$0xff]
    %v522 = vld [vmem:[#allocation2 + $0x98] sm:$0xff]
    %v523 = vld [vmem:[#allocation2 + $0xa0] sm:$0xff]
    %v524 = vld [vmem:[#allocation2 + $0xa8] sm:$0xff]
    %v525 = vld [vmem:[#allocation2 + $0xb0] sm:$0xff]
    %v526 = vld [vmem:[#allocation2 + $0xb8] sm:$0xff]
    %v527 = vld [vmem:[#allocation2 + $0xc0] sm:$0xff]
    %v528 = vld [vmem:[#allocation2 + $0xc8] sm:$0xff]
    %v529 = vld [vmem:[#allocation2 + $0xd0] sm:$0xff]
    %v530 = vld [vmem:[#allocation2 + $0xd8] sm:$0xff]
    %v531 = vld [vmem:[#allocation2 + $0xe0] sm:$0xff]
    %v532 = vld [vmem:[#allocation2 + $0xe8] sm:$0xff]
    %v533 = vld [vmem:[#allocation2 + $0xf0] sm:$0xff]
    %v534 = vld [vmem:[#allocation2 + $0xf8] sm:$0xff]
    %v535 = vpack.c.bf16 %v504, %v503
    %v536 = vpack.c.bf16 %v506, %v505
    %v537 = vpack.c.bf16 %v508, %v507
    %v538 = vpack.c.bf16 %v510, %v509
    %v539 = vpack.c.bf16 %v512, %v511
    %v540 = vpack.c.bf16 %v514, %v513
    %v541 = vpack.c.bf16 %v516, %v515
    %v542 = vpack.c.bf16 %v518, %v517
    %v543 = vpack.c.bf16 %v520, %v519
    %v544 = vpack.c.bf16 %v522, %v521
    %v545 = vpack.c.bf16 %v524, %v523
    %v546 = vpack.c.bf16 %v526, %v525
    %v547 = vpack.c.bf16 %v528, %v527
    %v548 = vpack.c.bf16 %v530, %v529
    %v549 = vpack.c.bf16 %v532, %v531
    %v550 = vpack.c.bf16 %v534, %v533
    %v567 = vunpack.c.l.b16 %v535
    %v568 = vunpack.c.h.b16 %v535
    %v569 = vunpack.c.l.b16 %v536
    %v570 = vunpack.c.h.b16 %v536
    %v571 = vunpack.c.l.b16 %v537
    %v572 = vunpack.c.h.b16 %v537
    %v573 = vunpack.c.l.b16 %v538
    %v574 = vunpack.c.h.b16 %v538
    %v575 = vunpack.c.l.b16 %v539
    %v576 = vunpack.c.h.b16 %v539
    %v577 = vunpack.c.l.b16 %v540
    %v578 = vunpack.c.h.b16 %v540
    %v579 = vunpack.c.l.b16 %v541
    %v580 = vunpack.c.h.b16 %v541
    %v581 = vunpack.c.l.b16 %v542
    %v582 = vunpack.c.h.b16 %v542
    %v583 = vunpack.c.l.b16 %v543
    %v584 = vunpack.c.h.b16 %v543
    %v585 = vunpack.c.l.b16 %v544
    %v586 = vunpack.c.h.b16 %v544
    %v587 = vunpack.c.l.b16 %v545
    %v588 = vunpack.c.h.b16 %v545
    %v589 = vunpack.c.l.b16 %v546
    %v590 = vunpack.c.h.b16 %v546
    %v591 = vunpack.c.l.b16 %v547
    %v592 = vunpack.c.h.b16 %v547
    %v593 = vunpack.c.l.b16 %v548
    %v594 = vunpack.c.h.b16 %v548
    %v595 = vunpack.c.l.b16 %v549
    %v596 = vunpack.c.h.b16 %v549
    %v597 = vunpack.c.l.b16 %v550
    %v598 = vunpack.c.h.b16 %v550
    %v599 = vpack.c.b16 %v567, %v567
    %v600 = vpack.c.b16 %v568, %v568
    %v601 = vpack.c.b16 %v569, %v569
    %v602 = vpack.c.b16 %v570, %v570
    %v603 = vpack.c.b16 %v571, %v571
    %v604 = vpack.c.b16 %v572, %v572
    %v605 = vpack.c.b16 %v573, %v573
    %v606 = vpack.c.b16 %v574, %v574
    %v607 = vpack.c.b16 %v575, %v575
    %v608 = vpack.c.b16 %v576, %v576
    %v609 = vpack.c.b16 %v577, %v577
    %v610 = vpack.c.b16 %v578, %v578
    %v611 = vpack.c.b16 %v579, %v579
    %v612 = vpack.c.b16 %v580, %v580
    %v613 = vpack.c.b16 %v581, %v581
    %v614 = vpack.c.b16 %v582, %v582
    %v615 = vpack.c.b16 %v583, %v583
    %v616 = vpack.c.b16 %v584, %v584
    %v617 = vpack.c.b16 %v585, %v585
    %v618 = vpack.c.b16 %v586, %v586
    %v619 = vpack.c.b16 %v587, %v587
    %v620 = vpack.c.b16 %v588, %v588
    %v621 = vpack.c.b16 %v589, %v589
    %v622 = vpack.c.b16 %v590, %v590
    %v623 = vpack.c.b16 %v591, %v591
    %v624 = vpack.c.b16 %v592, %v592
    %v625 = vpack.c.b16 %v593, %v593
    %v626 = vpack.c.b16 %v594, %v594
    %v627 = vpack.c.b16 %v595, %v595
    %v628 = vpack.c.b16 %v596, %v596
    %v629 = vpack.c.b16 %v597, %v597
    %v630 = vpack.c.b16 %v598, %v598
    %663 = vst [vmem:[%s3] sm:$0xf] %v599
    %664 = vst [vmem:[%s3 + $0x4] sm:$0xf] %v600
    %665 = vst [vmem:[%s3 + $0x8] sm:$0xf] %v601
    %666 = vst [vmem:[%s3 + $0xc] sm:$0xf] %v602
    %667 = vst [vmem:[%s3 + $0x10] sm:$0xf] %v603
    %668 = vst [vmem:[%s3 + $0x14] sm:$0xf] %v604
    %669 = vst [vmem:[%s3 + $0x18] sm:$0xf] %v605
    %670 = vst [vmem:[%s3 + $0x1c] sm:$0xf] %v606
    %671 = vst [vmem:[%s3 + $0x20] sm:$0xf] %v607
    %672 = vst [vmem:[%s3 + $0x24] sm:$0xf] %v608
    %673 = vst [vmem:[%s3 + $0x28] sm:$0xf] %v609
    %674 = vst [vmem:[%s3 + $0x2c] sm:$0xf] %v610
    %675 = vst [vmem:[%s3 + $0x30] sm:$0xf] %v611
    %676 = vst [vmem:[%s3 + $0x34] sm:$0xf] %v612
    %677 = vst [vmem:[%s3 + $0x38] sm:$0xf] %v613
    %678 = vst [vmem:[%s3 + $0x3c] sm:$0xf] %v614
    %679 = vst [vmem:[%s3 + $0x40] sm:$0xf] %v615
    %680 = vst [vmem:[%s3 + $0x44] sm:$0xf] %v616
    %681 = vst [vmem:[%s3 + $0x48] sm:$0xf] %v617
    %682 = vst [vmem:[%s3 + $0x4c] sm:$0xf] %v618
    %683 = vst [vmem:[%s3 + $0x50] sm:$0xf] %v619
    %684 = vst [vmem:[%s3 + $0x54] sm:$0xf] %v620
    %685 = vst [vmem:[%s3 + $0x58] sm:$0xf] %v621
    %686 = vst [vmem:[%s3 + $0x5c] sm:$0xf] %v622
    %687 = vst [vmem:[%s3 + $0x60] sm:$0xf] %v623
    %688 = vst [vmem:[%s3 + $0x64] sm:$0xf] %v624
    %689 = vst [vmem:[%s3 + $0x68] sm:$0xf] %v625
    %690 = vst [vmem:[%s3 + $0x6c] sm:$0xf] %v626
    %691 = vst [vmem:[%s3 + $0x70] sm:$0xf] %v627
    %692 = vst [vmem:[%s3 + $0x74] sm:$0xf] %v628
    %693 = vst [vmem:[%s3 + $0x78] sm:$0xf] %v629
    %694 = vst [vmem:[%s3 + $0x7c] sm:$0xf] %v630
  $region21: #{sgc_forward.3} parent=0 // pred_fallthru
    _
  // Predicated region
  $region22: #{sgc_forward.3} parent=0 // pred_check
    _
  $region23: #{sgc_forward.3} parent=0 // pred_check_branch
    %696 = sbr.rel (0) target = $region25
  $region24: #{sgc_forward.3} parent=0 // pred_region
    _
  $region25: #{sgc_forward.3} parent=0 // pred_fallthru
    _
  // Predicated region
  $region26: #{sgc_forward.3} parent=0 // pred_check
    _
  $region27: #{sgc_forward.3} parent=0 // pred_check_branch
    %698 = sbr.rel (0) target = $region29
  $region28: #{sgc_forward.3} parent=0 // pred_region
    _
  $region29: #{sgc_forward.3} parent=0 // pred_fallthru
    _

// kernel: sgc_forward.5
$region0: #{sgc_forward.5}
  #allocation0 [shape = 'u32[]', space=smem, size = 0x4, offset = 0x4, fixed_abs, tag = 'smem constant byte address 0x4 - core index']
  #allocation1 [shape = 'u32[144,128]{1,0:T(1,128)}', space=vmem, size = 0x12000, scoped, tag = 'internal scratch']
  #allocation2 [shape = 'f32[256,128]{1,0:T(8,128)}', space=vmem, size = 0x20000, scoped, tag = 'scratch operand']
  %s0 = inlined_call_operand.vmem [shape: bf16[256,256], index: 0, kind: input, shape index: {}]
  %s1 = inlined_call_operand.vmem [shape: bf16[256,128], index: 1, kind: input, shape index: {}]
  %s2 = inlined_call_operand.vmem [shape: f32[1,128], index: 2, kind: input, shape index: {}]
  %s3 = inlined_call_operand.vmem [shape: f32[256,128], index: 3, kind: output, shape index: {}]
  %s4 = sld [smem:[#allocation0]]
  $region30: #{sgc_forward.5} parent=0
    _
  %s6 = ssub.s32 1, %s4
  %s7 = scalar_select 0, %s6, %s4
  // Predicated region
  $region2: #{sgc_forward.5} parent=0 // pred_check
    _
  $region3: #{sgc_forward.5} parent=0 // pred_check_branch
    %9 = sbr.rel (0) target = $region5
  $region4: #{sgc_forward.5} parent=0 // pred_region
    _
  $region5: #{sgc_forward.5} parent=0 // pred_fallthru
    _
  // Predicated region
  $region6: #{sgc_forward.5} parent=0 // pred_check
    _
  $region7: #{sgc_forward.5} parent=0 // pred_check_branch
    %11 = sbr.rel (0) target = $region9
  $region8: #{sgc_forward.5} parent=0 // pred_region
    _
  $region9: #{sgc_forward.5} parent=0 // pred_fallthru
    _
  // Predicated region
  $region10: #{sgc_forward.5} parent=0 // pred_check
    _
  $region11: #{sgc_forward.5} parent=0 // pred_check_branch
    %13 = sbr.rel (0) target = $region13
  $region12: #{sgc_forward.5} parent=0 // pred_region
    _
  $region13: #{sgc_forward.5} parent=0 // pred_fallthru
    _
  %p15 = scmp.eq.s32.totalorder 0, 0
  // Predicated region
  $region14: #{sgc_forward.5} parent=0 // pred_check
    %p16 = pneg %p15
  $region15: #{sgc_forward.5} parent=0 // pred_check_branch
    %18 = sbr.rel (%p16) target = $region17
  $region16: #{sgc_forward.5} parent=0 // pred_region
    %19 = vst [vmem:[#allocation2] sm:$0xff] 0.0
    %20 = vst [vmem:[#allocation2 + $0x8] sm:$0xff] 0.0
    %21 = vst [vmem:[#allocation2 + $0x10] sm:$0xff] 0.0
    %22 = vst [vmem:[#allocation2 + $0x18] sm:$0xff] 0.0
    %23 = vst [vmem:[#allocation2 + $0x20] sm:$0xff] 0.0
    %24 = vst [vmem:[#allocation2 + $0x28] sm:$0xff] 0.0
    %25 = vst [vmem:[#allocation2 + $0x30] sm:$0xff] 0.0
    %26 = vst [vmem:[#allocation2 + $0x38] sm:$0xff] 0.0
    %27 = vst [vmem:[#allocation2 + $0x40] sm:$0xff] 0.0
    %28 = vst [vmem:[#allocation2 + $0x48] sm:$0xff] 0.0
    %29 = vst [vmem:[#allocation2 + $0x50] sm:$0xff] 0.0
    %30 = vst [vmem:[#allocation2 + $0x58] sm:$0xff] 0.0
    %31 = vst [vmem:[#allocation2 + $0x60] sm:$0xff] 0.0
    %32 = vst [vmem:[#allocation2 + $0x68] sm:$0xff] 0.0
    %33 = vst [vmem:[#allocation2 + $0x70] sm:$0xff] 0.0
    %34 = vst [vmem:[#allocation2 + $0x78] sm:$0xff] 0.0
    %35 = vst [vmem:[#allocation2 + $0x80] sm:$0xff] 0.0
    %36 = vst [vmem:[#allocation2 + $0x88] sm:$0xff] 0.0
    %37 = vst [vmem:[#allocation2 + $0x90] sm:$0xff] 0.0
    %38 = vst [vmem:[#allocation2 + $0x98] sm:$0xff] 0.0
    %39 = vst [vmem:[#allocation2 + $0xa0] sm:$0xff] 0.0
    %40 = vst [vmem:[#allocation2 + $0xa8] sm:$0xff] 0.0
    %41 = vst [vmem:[#allocation2 + $0xb0] sm:$0xff] 0.0
    %42 = vst [vmem:[#allocation2 + $0xb8] sm:$0xff] 0.0
    %43 = vst [vmem:[#allocation2 + $0xc0] sm:$0xff] 0.0
    %44 = vst [vmem:[#allocation2 + $0xc8] sm:$0xff] 0.0
    %45 = vst [vmem:[#allocation2 + $0xd0] sm:$0xff] 0.0
    %46 = vst [vmem:[#allocation2 + $0xd8] sm:$0xff] 0.0
    %47 = vst [vmem:[#allocation2 + $0xe0] sm:$0xff] 0.0
    %48 = vst [vmem:[#allocation2 + $0xe8] sm:$0xff] 0.0
    %49 = vst [vmem:[#allocation2 + $0xf0] sm:$0xff] 0.0
    %50 = vst [vmem:[#allocation2 + $0xf8] sm:$0xff] 0.0
  $region17: #{sgc_forward.5} parent=0 // pred_fallthru
    _
  %v51 = vld [vmem:[#allocation2] sm:$0xff]
  %v52 = vld [vmem:[#allocation2 + $0x8] sm:$0xff]
  %v53 = vld [vmem:[#allocation2 + $0x10] sm:$0xff]
  %v54 = vld [vmem:[#allocation2 + $0x18] sm:$0xff]
  %v55 = vld [vmem:[#allocation2 + $0x20] sm:$0xff]
  %v56 = vld [vmem:[#allocation2 + $0x28] sm:$0xff]
  %v57 = vld [vmem:[#allocation2 + $0x30] sm:$0xff]
  %v58 = vld [vmem:[#allocation2 + $0x38] sm:$0xff]
  %v59 = vld [vmem:[#allocation2 + $0x40] sm:$0xff]
  %v60 = vld [vmem:[#allocation2 + $0x48] sm:$0xff]
  %v61 = vld [vmem:[#allocation2 + $0x50] sm:$0xff]
  %v62 = vld [vmem:[#allocation2 + $0x58] sm:$0xff]
  %v63 = vld [vmem:[#allocation2 + $0x60] sm:$0xff]
  %v64 = vld [vmem:[#allocation2 + $0x68] sm:$0xff]
  %v65 = vld [vmem:[#allocation2 + $0x70] sm:$0xff]
  %v66 = vld [vmem:[#allocation2 + $0x78] sm:$0xff]
  %v67 = vld [vmem:[#allocation2 + $0x80] sm:$0xff]
  %v68 = vld [vmem:[#allocation2 + $0x88] sm:$0xff]
  %v69 = vld [vmem:[#allocation2 + $0x90] sm:$0xff]
  %v70 = vld [vmem:[#allocation2 + $0x98] sm:$0xff]
  %v71 = vld [vmem:[#allocation2 + $0xa0] sm:$0xff]
  %v72 = vld [vmem:[#allocation2 + $0xa8] sm:$0xff]
  %v73 = vld [vmem:[#allocation2 + $0xb0] sm:$0xff]
  %v74 = vld [vmem:[#allocation2 + $0xb8] sm:$0xff]
  %v75 = vld [vmem:[#allocation2 + $0xc0] sm:$0xff]
  %v76 = vld [vmem:[#allocation2 + $0xc8] sm:$0xff]
  %v77 = vld [vmem:[#allocation2 + $0xd0] sm:$0xff]
  %v78 = vld [vmem:[#allocation2 + $0xd8] sm:$0xff]
  %v79 = vld [vmem:[#allocation2 + $0xe0] sm:$0xff]
  %v80 = vld [vmem:[#allocation2 + $0xe8] sm:$0xff]
  %v81 = vld [vmem:[#allocation2 + $0xf0] sm:$0xff]
  %v82 = vld [vmem:[#allocation2 + $0xf8] sm:$0xff]
  %v83 = vld [vmem:[%s0] sm:$0xff]
  %v84 = vld [vmem:[%s0 + $0x8] sm:$0xff]
  %v85 = vld [vmem:[%s0 + $0x10] sm:$0xff]
  %v86 = vld [vmem:[%s0 + $0x18] sm:$0xff]
  %v87 = vld [vmem:[%s0 + $0x20] sm:$0xff]
  %v88 = vld [vmem:[%s0 + $0x28] sm:$0xff]
  %v89 = vld [vmem:[%s0 + $0x30] sm:$0xff]
  %v90 = vld [vmem:[%s0 + $0x38] sm:$0xff]
  %v91 = vld [vmem:[%s0 + $0x40] sm:$0xff]
  %v92 = vld [vmem:[%s0 + $0x48] sm:$0xff]
  %v93 = vld [vmem:[%s0 + $0x50] sm:$0xff]
  %v94 = vld [vmem:[%s0 + $0x58] sm:$0xff]
  %v95 = vld [vmem:[%s0 + $0x60] sm:$0xff]
  %v96 = vld [vmem:[%s0 + $0x68] sm:$0xff]
  %v97 = vld [vmem:[%s0 + $0x70] sm:$0xff]
  %v98 = vld [vmem:[%s0 + $0x78] sm:$0xff]
  %v99 = vld [vmem:[%s0 + $0x80] sm:$0xff]
  %v100 = vld [vmem:[%s0 + $0x88] sm:$0xff]
  %v101 = vld [vmem:[%s0 + $0x90] sm:$0xff]
  %v102 = vld [vmem:[%s0 + $0x98] sm:$0xff]
  %v103 = vld [vmem:[%s0 + $0xa0] sm:$0xff]
  %v104 = vld [vmem:[%s0 + $0xa8] sm:$0xff]
  %v105 = vld [vmem:[%s0 + $0xb0] sm:$0xff]
  %v106 = vld [vmem:[%s0 + $0xb8] sm:$0xff]
  %v107 = vld [vmem:[%s0 + $0xc0] sm:$0xff]
  %v108 = vld [vmem:[%s0 + $0xc8] sm:$0xff]
  %v109 = vld [vmem:[%s0 + $0xd0] sm:$0xff]
  %v110 = vld [vmem:[%s0 + $0xd8] sm:$0xff]
  %v111 = vld [vmem:[%s0 + $0xe0] sm:$0xff]
  %v112 = vld [vmem:[%s0 + $0xe8] sm:$0xff]
  %v113 = vld [vmem:[%s0 + $0xf0] sm:$0xff]
  %v114 = vld [vmem:[%s0 + $0xf8] sm:$0xff]
  %v115 = vld [vmem:[%s1] sm:$0xf]
  %v116 = vld [vmem:[%s1 + $0x4] sm:$0xf]
  %v117 = vld [vmem:[%s1 + $0x8] sm:$0xf]
  %v118 = vld [vmem:[%s1 + $0xc] sm:$0xf]
  %v119 = vld [vmem:[%s1 + $0x10] sm:$0xf]
  %v120 = vld [vmem:[%s1 + $0x14] sm:$0xf]
  %v121 = vld [vmem:[%s1 + $0x18] sm:$0xf]
  %v122 = vld [vmem:[%s1 + $0x1c] sm:$0xf]
  %v123 = vld [vmem:[%s1 + $0x20] sm:$0xf]
  %v124 = vld [vmem:[%s1 + $0x24] sm:$0xf]
  %v125 = vld [vmem:[%s1 + $0x28] sm:$0xf]
  %v126 = vld [vmem:[%s1 + $0x2c] sm:$0xf]
  %v127 = vld [vmem:[%s1 + $0x30] sm:$0xf]
  %v128 = vld [vmem:[%s1 + $0x34] sm:$0xf]
  %v129 = vld [vmem:[%s1 + $0x38] sm:$0xf]
  %v130 = vld [vmem:[%s1 + $0x3c] sm:$0xf]
  %v131 = vld [vmem:[%s1 + $0x40] sm:$0xf]
  %v132 = vld [vmem:[%s1 + $0x44] sm:$0xf]
  %v133 = vld [vmem:[%s1 + $0x48] sm:$0xf]
  %v134 = vld [vmem:[%s1 + $0x4c] sm:$0xf]
  %v135 = vld [vmem:[%s1 + $0x50] sm:$0xf]
  %v136 = vld [vmem:[%s1 + $0x54] sm:$0xf]
  %v137 = vld [vmem:[%s1 + $0x58] sm:$0xf]
  %v138 = vld [vmem:[%s1 + $0x5c] sm:$0xf]
  %v139 = vld [vmem:[%s1 + $0x60] sm:$0xf]
  %v140 = vld [vmem:[%s1 + $0x64] sm:$0xf]
  %v141 = vld [vmem:[%s1 + $0x68] sm:$0xf]
  %v142 = vld [vmem:[%s1 + $0x6c] sm:$0xf]
  %v143 = vld [vmem:[%s1 + $0x70] sm:$0xf]
  %v144 = vld [vmem:[%s1 + $0x74] sm:$0xf]
  %v145 = vld [vmem:[%s1 + $0x78] sm:$0xf]
  %v146 = vld [vmem:[%s1 + $0x7c] sm:$0xf]
  %v179 = vunpack.c.l.b16 %v83
  %v180 = vunpack.c.h.b16 %v83
  %v181 = vunpack.c.l.b16 %v84
  %v182 = vunpack.c.h.b16 %v84
  %v183 = vunpack.c.l.b16 %v85
  %v184 = vunpack.c.h.b16 %v85
  %v185 = vunpack.c.l.b16 %v86
  %v186 = vunpack.c.h.b16 %v86
  %v187 = vunpack.c.l.b16 %v87
  %v188 = vunpack.c.h.b16 %v87
  %v189 = vunpack.c.l.b16 %v88
  %v190 = vunpack.c.h.b16 %v88
  %v191 = vunpack.c.l.b16 %v89
  %v192 = vunpack.c.h.b16 %v89
  %v193 = vunpack.c.l.b16 %v90
  %v194 = vunpack.c.h.b16 %v90
  %v195 = vunpack.c.l.b16 %v91
  %v196 = vunpack.c.h.b16 %v91
  %v197 = vunpack.c.l.b16 %v92
  %v198 = vunpack.c.h.b16 %v92
  %v199 = vunpack.c.l.b16 %v93
  %v200 = vunpack.c.h.b16 %v93
  %v201 = vunpack.c.l.b16 %v94
  %v202 = vunpack.c.h.b16 %v94
  %v203 = vunpack.c.l.b16 %v95
  %v204 = vunpack.c.h.b16 %v95
  %v205 = vunpack.c.l.b16 %v96
  %v206 = vunpack.c.h.b16 %v96
  %v207 = vunpack.c.l.b16 %v97
  %v208 = vunpack.c.h.b16 %v97
  %v209 = vunpack.c.l.b16 %v98
  %v210 = vunpack.c.h.b16 %v98
  %v211 = vunpack.c.l.b16 %v99
  %v212 = vunpack.c.h.b16 %v99
  %v213 = vunpack.c.l.b16 %v100
  %v214 = vunpack.c.h.b16 %v100
  %v215 = vunpack.c.l.b16 %v101
  %v216 = vunpack.c.h.b16 %v101
  %v217 = vunpack.c.l.b16 %v102
  %v218 = vunpack.c.h.b16 %v102
  %v219 = vunpack.c.l.b16 %v103
  %v220 = vunpack.c.h.b16 %v103
  %v221 = vunpack.c.l.b16 %v104
  %v222 = vunpack.c.h.b16 %v104
  %v223 = vunpack.c.l.b16 %v105
  %v224 = vunpack.c.h.b16 %v105
  %v225 = vunpack.c.l.b16 %v106
  %v226 = vunpack.c.h.b16 %v106
  %v227 = vunpack.c.l.b16 %v107
  %v228 = vunpack.c.h.b16 %v107
  %v229 = vunpack.c.l.b16 %v108
  %v230 = vunpack.c.h.b16 %v108
  %v231 = vunpack.c.l.b16 %v109
  %v232 = vunpack.c.h.b16 %v109
  %v233 = vunpack.c.l.b16 %v110
  %v234 = vunpack.c.h.b16 %v110
  %v235 = vunpack.c.l.b16 %v111
  %v236 = vunpack.c.h.b16 %v111
  %v237 = vunpack.c.l.b16 %v112
  %v238 = vunpack.c.h.b16 %v112
  %v239 = vunpack.c.l.b16 %v113
  %v240 = vunpack.c.h.b16 %v113
  %v241 = vunpack.c.l.b16 %v114
  %v242 = vunpack.c.h.b16 %v114
  %v243 = vpack.c.b16 %v181, %v179
  %v244 = vpack.c.b16 %v182, %v180
  %v245 = vpack.c.b16 %v185, %v183
  %v246 = vpack.c.b16 %v186, %v184
  %v247 = vpack.c.b16 %v189, %v187
  %v248 = vpack.c.b16 %v190, %v188
  %v249 = vpack.c.b16 %v193, %v191
  %v250 = vpack.c.b16 %v194, %v192
  %v251 = vpack.c.b16 %v197, %v195
  %v252 = vpack.c.b16 %v198, %v196
  %v253 = vpack.c.b16 %v201, %v199
  %v254 = vpack.c.b16 %v202, %v200
  %v255 = vpack.c.b16 %v205, %v203
  %v256 = vpack.c.b16 %v206, %v204
  %v257 = vpack.c.b16 %v209, %v207
  %v258 = vpack.c.b16 %v210, %v208
  %v259 = vpack.c.b16 %v213, %v211
  %v260 = vpack.c.b16 %v214, %v212
  %v261 = vpack.c.b16 %v217, %v215
  %v262 = vpack.c.b16 %v218, %v216
  %v263 = vpack.c.b16 %v221, %v219
  %v264 = vpack.c.b16 %v222, %v220
  %v265 = vpack.c.b16 %v225, %v223
  %v266 = vpack.c.b16 %v226, %v224
  %v267 = vpack.c.b16 %v229, %v227
  %v268 = vpack.c.b16 %v230, %v228
  %v269 = vpack.c.b16 %v233, %v231
  %v270 = vpack.c.b16 %v234, %v232
  %v271 = vpack.c.b16 %v237, %v235
  %v272 = vpack.c.b16 %v238, %v236
  %v273 = vpack.c.b16 %v241, %v239
  %v274 = vpack.c.b16 %v242, %v240
  %v339 = vunpack.c.l.b16 %v115
  %v340 = vunpack.c.l.b16 %v116
  %v341 = vunpack.c.l.b16 %v117
  %v342 = vunpack.c.l.b16 %v118
  %v343 = vunpack.c.l.b16 %v119
  %v344 = vunpack.c.l.b16 %v120
  %v345 = vunpack.c.l.b16 %v121
  %v346 = vunpack.c.l.b16 %v122
  %v347 = vunpack.c.l.b16 %v123
  %v348 = vunpack.c.l.b16 %v124
  %v349 = vunpack.c.l.b16 %v125
  %v350 = vunpack.c.l.b16 %v126
  %v351 = vunpack.c.l.b16 %v127
  %v352 = vunpack.c.l.b16 %v128
  %v353 = vunpack.c.l.b16 %v129
  %v354 = vunpack.c.l.b16 %v130
  %v355 = vunpack.c.l.b16 %v131
  %v356 = vunpack.c.l.b16 %v132
  %v357 = vunpack.c.l.b16 %v133
  %v358 = vunpack.c.l.b16 %v134
  %v359 = vunpack.c.l.b16 %v135
  %v360 = vunpack.c.l.b16 %v136
  %v361 = vunpack.c.l.b16 %v137
  %v362 = vunpack.c.l.b16 %v138
  %v363 = vunpack.c.l.b16 %v139
  %v364 = vunpack.c.l.b16 %v140
  %v365 = vunpack.c.l.b16 %v141
  %v366 = vunpack.c.l.b16 %v142
  %v367 = vunpack.c.l.b16 %v143
  %v368 = vunpack.c.l.b16 %v144
  %v369 = vunpack.c.l.b16 %v145
  %v370 = vunpack.c.l.b16 %v146
  %v371 = vpack.c.b16 %v340, %v339
  %v372 = vpack.c.b16 %v342, %v341
  %v373 = vpack.c.b16 %v344, %v343
  %v374 = vpack.c.b16 %v346, %v345
  %v375 = vpack.c.b16 %v348, %v347
  %v376 = vpack.c.b16 %v350, %v349
  %v377 = vpack.c.b16 %v352, %v351
  %v378 = vpack.c.b16 %v354, %v353
  %v379 = vpack.c.b16 %v356, %v355
  %v380 = vpack.c.b16 %v358, %v357
  %v381 = vpack.c.b16 %v360, %v359
  %v382 = vpack.c.b16 %v362, %v361
  %v383 = vpack.c.b16 %v364, %v363
  %v384 = vpack.c.b16 %v366, %v365
  %v385 = vpack.c.b16 %v368, %v367
  %v386 = vpack.c.b16 %v370, %v369
  %403 = vmatprep.subr.bf16.mxu0 0
  %404 = vmatpush1.bf16.msra.mxu0 %v371
  %405 = vmatprep.subr.bf16.mxu0 0
  %406 = vmatpush1.bf16.msra.mxu0 %v372
  %407 = vmatprep.subr.bf16.mxu0 0
  %408 = vmatpush1.bf16.msra.mxu0 %v373
  %409 = vmatprep.subr.bf16.mxu0 0
  %410 = vmatpush1.bf16.msra.mxu0 %v374
  %411 = vmatprep.subr.bf16.mxu0 0
  %412 = vmatpush1.bf16.msra.mxu0 %v375
  %413 = vmatprep.subr.bf16.mxu0 0
  %414 = vmatpush1.bf16.msra.mxu0 %v376
  %415 = vmatprep.subr.bf16.mxu0 0
  %416 = vmatpush1.bf16.msra.mxu0 %v377
  %417 = vmatprep.subr.bf16.mxu0 0
  %418 = vmatpush1.bf16.msra.mxu0 %v378
  %419 = vmatprep.subr.bf16.mxu0 0
  %420 = vmatpush1.bf16.msra.mxu0 %v379
  %421 = vmatprep.subr.bf16.mxu0 0
  %422 = vmatpush1.bf16.msra.mxu0 %v380
  %423 = vmatprep.subr.bf16.mxu0 0
  %424 = vmatpush1.bf16.msra.mxu0 %v381
  %425 = vmatprep.subr.bf16.mxu0 0
  %426 = vmatpush1.bf16.msra.mxu0 %v382
  %427 = vmatprep.subr.bf16.mxu0 0
  %428 = vmatpush1.bf16.msra.mxu0 %v383
  %429 = vmatprep.subr.bf16.mxu0 0
  %430 = vmatpush1.bf16.msra.mxu0 %v384
  %431 = vmatprep.subr.bf16.mxu0 0
  %432 = vmatpush1.bf16.msra.mxu0 %v385
  %433 = vmatprep.subr.bf16.mxu0 0
  %434 = vmatpush1.bf16.msra.mxu0 %v386
  %435 = vmatprep.mubr.bf16.mxu0 %v244
  %436 = vmatmul.mubr.bf16.gmra.mrb[0].mxu0 %v243
  %v437 = vpop.f32.mrb[0].mxu0
  %v438 = vadd.f32 0.0, %v437
  %v439 = vpop.f32.mrb[0].mxu0
  %v440 = vpop.f32.mrb[0].mxu0
  %v441 = vadd.f32 0.0, %v440
  %v442 = vpop.f32.mrb[0].mxu0
  %443 = vmatprep.mubr.bf16.mxu0 %v246
  %444 = vmatmul.mubr.bf16.gmra.mrb[0].mxu0 %v245
  %v445 = vpop.f32.mrb[0].mxu0
  %v446 = vadd.f32 0.0, %v445
  %v447 = vpop.f32.mrb[0].mxu0
  %v448 = vpop.f32.mrb[0].mxu0
  %v449 = vadd.f32 0.0, %v448
  %v450 = vpop.f32.mrb[0].mxu0
  %451 = vmatprep.mubr.bf16.mxu0 %v248
  %452 = vmatmul.mubr.bf16.gmra.mrb[0].mxu0 %v247
  %v453 = vpop.f32.mrb[0].mxu0
  %v454 = vadd.f32 0.0, %v453
  %v455 = vpop.f32.mrb[0].mxu0
  %v456 = vpop.f32.mrb[0].mxu0
  %v457 = vadd.f32 0.0, %v456
  %v458 = vpop.f32.mrb[0].mxu0
  %459 = vmatprep.mubr.bf16.mxu0 %v250
  %460 = vmatmul.mubr.bf16.gmra.mrb[0].mxu0 %v249
  %v461 = vpop.f32.mrb[0].mxu0
  %v462 = vadd.f32 0.0, %v461
  %v463 = vpop.f32.mrb[0].mxu0
  %v464 = vpop.f32.mrb[0].mxu0
  %v465 = vadd.f32 0.0, %v464
  %v466 = vpop.f32.mrb[0].mxu0
  %467 = vmatprep.mubr.bf16.mxu0 %v252
  %468 = vmatmul.mubr.bf16.gmra.mrb[0].mxu0 %v251
  %v469 = vpop.f32.mrb[0].mxu0
  %v470 = vadd.f32 0.0, %v469
  %v471 = vpop.f32.mrb[0].mxu0
  %v472 = vpop.f32.mrb[0].mxu0
  %v473 = vadd.f32 0.0, %v472
  %v474 = vpop.f32.mrb[0].mxu0
  %475 = vmatprep.mubr.bf16.mxu0 %v254
  %476 = vmatmul.mubr.bf16.gmra.mrb[0].mxu0 %v253
  %v477 = vpop.f32.mrb[0].mxu0
  %v478 = vadd.f32 0.0, %v477
  %v479 = vpop.f32.mrb[0].mxu0
  %v480 = vpop.f32.mrb[0].mxu0
  %v481 = vadd.f32 0.0, %v480
  %v482 = vpop.f32.mrb[0].mxu0
  %483 = vmatprep.mubr.bf16.mxu0 %v256
  %484 = vmatmul.mubr.bf16.gmra.mrb[0].mxu0 %v255
  %v485 = vpop.f32.mrb[0].mxu0
  %v486 = vadd.f32 0.0, %v485
  %v487 = vpop.f32.mrb[0].mxu0
  %v488 = vpop.f32.mrb[0].mxu0
  %v489 = vadd.f32 0.0, %v488
  %v490 = vpop.f32.mrb[0].mxu0
  %491 = vmatprep.mubr.bf16.mxu0 %v258
  %492 = vmatmul.mubr.bf16.gmra.mrb[0].mxu0 %v257
  %v493 = vpop.f32.mrb[0].mxu0
  %v494 = vadd.f32 0.0, %v493
  %v495 = vpop.f32.mrb[0].mxu0
  %v496 = vpop.f32.mrb[0].mxu0
  %v497 = vadd.f32 0.0, %v496
  %v498 = vpop.f32.mrb[0].mxu0
  %499 = vmatprep.mubr.bf16.mxu0 %v260
  %500 = vmatmul.mubr.bf16.gmra.mrb[0].mxu0 %v259
  %v501 = vpop.f32.mrb[0].mxu0
  %v502 = vadd.f32 0.0, %v501
  %v503 = vpop.f32.mrb[0].mxu0
  %v504 = vpop.f32.mrb[0].mxu0
  %v505 = vadd.f32 0.0, %v504
  %v506 = vpop.f32.mrb[0].mxu0
  %507 = vmatprep.mubr.bf16.mxu0 %v262
  %508 = vmatmul.mubr.bf16.gmra.mrb[0].mxu0 %v261
  %v509 = vpop.f32.mrb[0].mxu0
  %v510 = vadd.f32 0.0, %v509
  %v511 = vpop.f32.mrb[0].mxu0
  %v512 = vpop.f32.mrb[0].mxu0
  %v513 = vadd.f32 0.0, %v512
  %v514 = vpop.f32.mrb[0].mxu0
  %515 = vmatprep.mubr.bf16.mxu0 %v264
  %516 = vmatmul.mubr.bf16.gmra.mrb[0].mxu0 %v263
  %v517 = vpop.f32.mrb[0].mxu0
  %v518 = vadd.f32 0.0, %v517
  %v519 = vpop.f32.mrb[0].mxu0
  %v520 = vpop.f32.mrb[0].mxu0
  %v521 = vadd.f32 0.0, %v520
  %v522 = vpop.f32.mrb[0].mxu0
  %523 = vmatprep.mubr.bf16.mxu0 %v266
  %524 = vmatmul.mubr.bf16.gmra.mrb[0].mxu0 %v265
  %v525 = vpop.f32.mrb[0].mxu0
  %v526 = vadd.f32 0.0, %v525
  %v527 = vpop.f32.mrb[0].mxu0
  %v528 = vpop.f32.mrb[0].mxu0
  %v529 = vadd.f32 0.0, %v528
  %v530 = vpop.f32.mrb[0].mxu0
  %531 = vmatprep.mubr.bf16.mxu0 %v268
  %532 = vmatmul.mubr.bf16.gmra.mrb[0].mxu0 %v267
  %v533 = vpop.f32.mrb[0].mxu0
  %v534 = vadd.f32 0.0, %v533
  %v535 = vpop.f32.mrb[0].mxu0
  %v536 = vpop.f32.mrb[0].mxu0
  %v537 = vadd.f32 0.0, %v536
  %v538 = vpop.f32.mrb[0].mxu0
  %539 = vmatprep.mubr.bf16.mxu0 %v270
  %540 = vmatmul.mubr.bf16.gmra.mrb[0].mxu0 %v269
  %v541 = vpop.f32.mrb[0].mxu0
  %v542 = vadd.f32 0.0, %v541
  %v543 = vpop.f32.mrb[0].mxu0
  %v544 = vpop.f32.mrb[0].mxu0
  %v545 = vadd.f32 0.0, %v544
  %v546 = vpop.f32.mrb[0].mxu0
  %547 = vmatprep.mubr.bf16.mxu0 %v272
  %548 = vmatmul.mubr.bf16.gmra.mrb[0].mxu0 %v271
  %v549 = vpop.f32.mrb[0].mxu0
  %v550 = vadd.f32 0.0, %v549
  %v551 = vpop.f32.mrb[0].mxu0
  %v552 = vpop.f32.mrb[0].mxu0
  %v553 = vadd.f32 0.0, %v552
  %v554 = vpop.f32.mrb[0].mxu0
  %555 = vmatprep.mubr.bf16.mxu0 %v274
  %556 = vmatmul.mubr.bf16.gmra.mrb[0].mxu0 %v273
  %v557 = vpop.f32.mrb[0].mxu0
  %v558 = vadd.f32 0.0, %v557
  %v559 = vpop.f32.mrb[0].mxu0
  %v560 = vpop.f32.mrb[0].mxu0
  %v561 = vadd.f32 0.0, %v560
  %v562 = vpop.f32.mrb[0].mxu0
  %563 = vdwg.mxu0
  %v564 = vadd.f32 %v51, %v438
  %v565 = vadd.f32 %v52, %v441
  %v566 = vadd.f32 %v53, %v446
  %v567 = vadd.f32 %v54, %v449
  %v568 = vadd.f32 %v55, %v454
  %v569 = vadd.f32 %v56, %v457
  %v570 = vadd.f32 %v57, %v462
  %v571 = vadd.f32 %v58, %v465
  %v572 = vadd.f32 %v59, %v470
  %v573 = vadd.f32 %v60, %v473
  %v574 = vadd.f32 %v61, %v478
  %v575 = vadd.f32 %v62, %v481
  %v576 = vadd.f32 %v63, %v486
  %v577 = vadd.f32 %v64, %v489
  %v578 = vadd.f32 %v65, %v494
  %v579 = vadd.f32 %v66, %v497
  %v580 = vadd.f32 %v67, %v502
  %v581 = vadd.f32 %v68, %v505
  %v582 = vadd.f32 %v69, %v510
  %v583 = vadd.f32 %v70, %v513
  %v584 = vadd.f32 %v71, %v518
  %v585 = vadd.f32 %v72, %v521
  %v586 = vadd.f32 %v73, %v526
  %v587 = vadd.f32 %v74, %v529
  %v588 = vadd.f32 %v75, %v534
  %v589 = vadd.f32 %v76, %v537
  %v590 = vadd.f32 %v77, %v542
  %v591 = vadd.f32 %v78, %v545
  %v592 = vadd.f32 %v79, %v550
  %v593 = vadd.f32 %v80, %v553
  %v594 = vadd.f32 %v81, %v558
  %v595 = vadd.f32 %v82, %v561
  %596 = vst [vmem:[#allocation2] sm:$0xff] %v564
  %597 = vst [vmem:[#allocation2 + $0x8] sm:$0xff] %v565
  %598 = vst [vmem:[#allocation2 + $0x10] sm:$0xff] %v566
  %599 = vst [vmem:[#allocation2 + $0x18] sm:$0xff] %v567
  %600 = vst [vmem:[#allocation2 + $0x20] sm:$0xff] %v568
  %601 = vst [vmem:[#allocation2 + $0x28] sm:$0xff] %v569
  %602 = vst [vmem:[#allocation2 + $0x30] sm:$0xff] %v570
  %603 = vst [vmem:[#allocation2 + $0x38] sm:$0xff] %v571
  %604 = vst [vmem:[#allocation2 + $0x40] sm:$0xff] %v572
  %605 = vst [vmem:[#allocation2 + $0x48] sm:$0xff] %v573
  %606 = vst [vmem:[#allocation2 + $0x50] sm:$0xff] %v574
  %607 = vst [vmem:[#allocation2 + $0x58] sm:$0xff] %v575
  %608 = vst [vmem:[#allocation2 + $0x60] sm:$0xff] %v576
  %609 = vst [vmem:[#allocation2 + $0x68] sm:$0xff] %v577
  %610 = vst [vmem:[#allocation2 + $0x70] sm:$0xff] %v578
  %611 = vst [vmem:[#allocation2 + $0x78] sm:$0xff] %v579
  %612 = vst [vmem:[#allocation2 + $0x80] sm:$0xff] %v580
  %613 = vst [vmem:[#allocation2 + $0x88] sm:$0xff] %v581
  %614 = vst [vmem:[#allocation2 + $0x90] sm:$0xff] %v582
  %615 = vst [vmem:[#allocation2 + $0x98] sm:$0xff] %v583
  %616 = vst [vmem:[#allocation2 + $0xa0] sm:$0xff] %v584
  %617 = vst [vmem:[#allocation2 + $0xa8] sm:$0xff] %v585
  %618 = vst [vmem:[#allocation2 + $0xb0] sm:$0xff] %v586
  %619 = vst [vmem:[#allocation2 + $0xb8] sm:$0xff] %v587
  %620 = vst [vmem:[#allocation2 + $0xc0] sm:$0xff] %v588
  %621 = vst [vmem:[#allocation2 + $0xc8] sm:$0xff] %v589
  %622 = vst [vmem:[#allocation2 + $0xd0] sm:$0xff] %v590
  %623 = vst [vmem:[#allocation2 + $0xd8] sm:$0xff] %v591
  %624 = vst [vmem:[#allocation2 + $0xe0] sm:$0xff] %v592
  %625 = vst [vmem:[#allocation2 + $0xe8] sm:$0xff] %v593
  %626 = vst [vmem:[#allocation2 + $0xf0] sm:$0xff] %v594
  %627 = vst [vmem:[#allocation2 + $0xf8] sm:$0xff] %v595
  // Predicated region
  $region18: #{sgc_forward.5} parent=0 // pred_check
    %p628 = pneg %p15
  $region19: #{sgc_forward.5} parent=0 // pred_check_branch
    %630 = sbr.rel (%p628) target = $region21
  $region20: #{sgc_forward.5} parent=0 // pred_region
    %v631 = vld [vmem:[#allocation2] sm:$0xff]
    %v632 = vld [vmem:[#allocation2 + $0x8] sm:$0xff]
    %v633 = vld [vmem:[#allocation2 + $0x10] sm:$0xff]
    %v634 = vld [vmem:[#allocation2 + $0x18] sm:$0xff]
    %v635 = vld [vmem:[#allocation2 + $0x20] sm:$0xff]
    %v636 = vld [vmem:[#allocation2 + $0x28] sm:$0xff]
    %v637 = vld [vmem:[#allocation2 + $0x30] sm:$0xff]
    %v638 = vld [vmem:[#allocation2 + $0x38] sm:$0xff]
    %v639 = vld [vmem:[#allocation2 + $0x40] sm:$0xff]
    %v640 = vld [vmem:[#allocation2 + $0x48] sm:$0xff]
    %v641 = vld [vmem:[#allocation2 + $0x50] sm:$0xff]
    %v642 = vld [vmem:[#allocation2 + $0x58] sm:$0xff]
    %v643 = vld [vmem:[#allocation2 + $0x60] sm:$0xff]
    %v644 = vld [vmem:[#allocation2 + $0x68] sm:$0xff]
    %v645 = vld [vmem:[#allocation2 + $0x70] sm:$0xff]
    %v646 = vld [vmem:[#allocation2 + $0x78] sm:$0xff]
    %v647 = vld [vmem:[#allocation2 + $0x80] sm:$0xff]
    %v648 = vld [vmem:[#allocation2 + $0x88] sm:$0xff]
    %v649 = vld [vmem:[#allocation2 + $0x90] sm:$0xff]
    %v650 = vld [vmem:[#allocation2 + $0x98] sm:$0xff]
    %v651 = vld [vmem:[#allocation2 + $0xa0] sm:$0xff]
    %v652 = vld [vmem:[#allocation2 + $0xa8] sm:$0xff]
    %v653 = vld [vmem:[#allocation2 + $0xb0] sm:$0xff]
    %v654 = vld [vmem:[#allocation2 + $0xb8] sm:$0xff]
    %v655 = vld [vmem:[#allocation2 + $0xc0] sm:$0xff]
    %v656 = vld [vmem:[#allocation2 + $0xc8] sm:$0xff]
    %v657 = vld [vmem:[#allocation2 + $0xd0] sm:$0xff]
    %v658 = vld [vmem:[#allocation2 + $0xd8] sm:$0xff]
    %v659 = vld [vmem:[#allocation2 + $0xe0] sm:$0xff]
    %v660 = vld [vmem:[#allocation2 + $0xe8] sm:$0xff]
    %v661 = vld [vmem:[#allocation2 + $0xf0] sm:$0xff]
    %v662 = vld [vmem:[#allocation2 + $0xf8] sm:$0xff]
    %v663 = vld [vmem:[%s2] sm:$0x1]
    %v665 = vlaneseq
    %v666 = vshrl.u32 %v665, 7
    %v667 = vsub.s32 0, %v666
    %v668 = vrot.slane %v663, %v667
    %v670 = vadd.f32 %v631, %v668
    %v671 = vadd.f32 %v632, %v668
    %v672 = vadd.f32 %v633, %v668
    %v673 = vadd.f32 %v634, %v668
    %v674 = vadd.f32 %v635, %v668
    %v675 = vadd.f32 %v636, %v668
    %v676 = vadd.f32 %v637, %v668
    %v677 = vadd.f32 %v638, %v668
    %v678 = vadd.f32 %v639, %v668
    %v679 = vadd.f32 %v640, %v668
    %v680 = vadd.f32 %v641, %v668
    %v681 = vadd.f32 %v642, %v668
    %v682 = vadd.f32 %v643, %v668
    %v683 = vadd.f32 %v644, %v668
    %v684 = vadd.f32 %v645, %v668
    %v685 = vadd.f32 %v646, %v668
    %v686 = vadd.f32 %v647, %v668
    %v687 = vadd.f32 %v648, %v668
    %v688 = vadd.f32 %v649, %v668
    %v689 = vadd.f32 %v650, %v668
    %v690 = vadd.f32 %v651, %v668
    %v691 = vadd.f32 %v652, %v668
    %v692 = vadd.f32 %v653, %v668
    %v693 = vadd.f32 %v654, %v668
    %v694 = vadd.f32 %v655, %v668
    %v695 = vadd.f32 %v656, %v668
    %v696 = vadd.f32 %v657, %v668
    %v697 = vadd.f32 %v658, %v668
    %v698 = vadd.f32 %v659, %v668
    %v699 = vadd.f32 %v660, %v668
    %v700 = vadd.f32 %v661, %v668
    %v701 = vadd.f32 %v662, %v668
    %702 = vst [vmem:[%s3] sm:$0xff] %v670
    %703 = vst [vmem:[%s3 + $0x8] sm:$0xff] %v671
    %704 = vst [vmem:[%s3 + $0x10] sm:$0xff] %v672
    %705 = vst [vmem:[%s3 + $0x18] sm:$0xff] %v673
    %706 = vst [vmem:[%s3 + $0x20] sm:$0xff] %v674
    %707 = vst [vmem:[%s3 + $0x28] sm:$0xff] %v675
    %708 = vst [vmem:[%s3 + $0x30] sm:$0xff] %v676
    %709 = vst [vmem:[%s3 + $0x38] sm:$0xff] %v677
    %710 = vst [vmem:[%s3 + $0x40] sm:$0xff] %v678
    %711 = vst [vmem:[%s3 + $0x48] sm:$0xff] %v679
    %712 = vst [vmem:[%s3 + $0x50] sm:$0xff] %v680
    %713 = vst [vmem:[%s3 + $0x58] sm:$0xff] %v681
    %714 = vst [vmem:[%s3 + $0x60] sm:$0xff] %v682
    %715 = vst [vmem:[%s3 + $0x68] sm:$0xff] %v683
    %716 = vst [vmem:[%s3 + $0x70] sm:$0xff] %v684
    %717 = vst [vmem:[%s3 + $0x78] sm:$0xff] %v685
    %718 = vst [vmem:[%s3 + $0x80] sm:$0xff] %v686
    %719 = vst [vmem:[%s3 + $0x88] sm:$0xff] %v687
    %720 = vst [vmem:[%s3 + $0x90] sm:$0xff] %v688
    %721 = vst [vmem:[%s3 + $0x98] sm:$0xff] %v689
    %722 = vst [vmem:[%s3 + $0xa0] sm:$0xff] %v690
    %723 = vst [vmem:[%s3 + $0xa8] sm:$0xff] %v691
    %724 = vst [vmem:[%s3 + $0xb0] sm:$0xff] %v692
    %725 = vst [vmem:[%s3 + $0xb8] sm:$0xff] %v693
    %726 = vst [vmem:[%s3 + $0xc0] sm:$0xff] %v694
    %727 = vst [vmem:[%s3 + $0xc8] sm:$0xff] %v695
    %728 = vst [vmem:[%s3 + $0xd0] sm:$0xff] %v696
    %729 = vst [vmem:[%s3 + $0xd8] sm:$0xff] %v697
    %730 = vst [vmem:[%s3 + $0xe0] sm:$0xff] %v698
    %731 = vst [vmem:[%s3 + $0xe8] sm:$0xff] %v699
    %732 = vst [vmem:[%s3 + $0xf0] sm:$0xff] %v700
    %733 = vst [vmem:[%s3 + $0xf8] sm:$0xff] %v701
  $region21: #{sgc_forward.5} parent=0 // pred_fallthru
    _
  // Predicated region
  $region22: #{sgc_forward.5} parent=0 // pred_check
    _
  $region23: #{sgc_forward.5} parent=0 // pred_check_branch
    %735 = sbr.rel (0) target = $region25
  $region24: #{sgc_forward.5} parent=0 // pred_region
    _
  $region25: #{sgc_forward.5} parent=0 // pred_fallthru
    _
  // Predicated region
  $region26: #{sgc_forward.5} parent=0 // pred_check
    _
  $region27: #{sgc_forward.5} parent=0 // pred_check_branch
    %737 = sbr.rel (0) target = $region29
  $region28: #{sgc_forward.5} parent=0 // pred_region
    _
  $region29: #{sgc_forward.5} parent=0 // pred_fallthru
    _

// kernel: sgc_forward.4
$region0: #{sgc_forward.4}
  #allocation0 [shape = 'u32[]', space=smem, size = 0x4, offset = 0x4, fixed_abs, tag = 'smem constant byte address 0x4 - core index']
  #allocation1 [shape = 'u32[144,128]{1,0:T(1,128)}', space=vmem, size = 0x12000, scoped, tag = 'internal scratch']
  #allocation2 [shape = 'f32[256,128]{1,0:T(8,128)}', space=vmem, size = 0x20000, scoped, tag = 'scratch operand']
  %s0 = inlined_call_operand.vmem [shape: bf16[256,256], index: 0, kind: input, shape index: {}]
  %s1 = inlined_call_operand.vmem [shape: bf16[256,128], index: 1, kind: input, shape index: {}]
  %s2 = inlined_call_operand.vmem [shape: f32[1,128], index: 2, kind: input, shape index: {}]
  %s3 = inlined_call_operand.vmem [shape: bf16[256,128], index: 3, kind: output, shape index: {}]
  %s4 = sld [smem:[#allocation0]]
  $region30: #{sgc_forward.4} parent=0
    _
  %s6 = ssub.s32 1, %s4
  %s7 = scalar_select 0, %s6, %s4
  // Predicated region
  $region2: #{sgc_forward.4} parent=0 // pred_check
    _
  $region3: #{sgc_forward.4} parent=0 // pred_check_branch
    %9 = sbr.rel (0) target = $region5
  $region4: #{sgc_forward.4} parent=0 // pred_region
    _
  $region5: #{sgc_forward.4} parent=0 // pred_fallthru
    _
  // Predicated region
  $region6: #{sgc_forward.4} parent=0 // pred_check
    _
  $region7: #{sgc_forward.4} parent=0 // pred_check_branch
    %11 = sbr.rel (0) target = $region9
  $region8: #{sgc_forward.4} parent=0 // pred_region
    _
  $region9: #{sgc_forward.4} parent=0 // pred_fallthru
    _
  // Predicated region
  $region10: #{sgc_forward.4} parent=0 // pred_check
    _
  $region11: #{sgc_forward.4} parent=0 // pred_check_branch
    %13 = sbr.rel (0) target = $region13
  $region12: #{sgc_forward.4} parent=0 // pred_region
    _
  $region13: #{sgc_forward.4} parent=0 // pred_fallthru
    _
  %p15 = scmp.eq.s32.totalorder 0, 0
  // Predicated region
  $region14: #{sgc_forward.4} parent=0 // pred_check
    %p16 = pneg %p15
  $region15: #{sgc_forward.4} parent=0 // pred_check_branch
    %18 = sbr.rel (%p16) target = $region17
  $region16: #{sgc_forward.4} parent=0 // pred_region
    %19 = vst [vmem:[#allocation2] sm:$0xff] 0.0
    %20 = vst [vmem:[#allocation2 + $0x8] sm:$0xff] 0.0
    %21 = vst [vmem:[#allocation2 + $0x10] sm:$0xff] 0.0
    %22 = vst [vmem:[#allocation2 + $0x18] sm:$0xff] 0.0
    %23 = vst [vmem:[#allocation2 + $0x20] sm:$0xff] 0.0
    %24 = vst [vmem:[#allocation2 + $0x28] sm:$0xff] 0.0
    %25 = vst [vmem:[#allocation2 + $0x30] sm:$0xff] 0.0
    %26 = vst [vmem:[#allocation2 + $0x38] sm:$0xff] 0.0
    %27 = vst [vmem:[#allocation2 + $0x40] sm:$0xff] 0.0
    %28 = vst [vmem:[#allocation2 + $0x48] sm:$0xff] 0.0
    %29 = vst [vmem:[#allocation2 + $0x50] sm:$0xff] 0.0
    %30 = vst [vmem:[#allocation2 + $0x58] sm:$0xff] 0.0
    %31 = vst [vmem:[#allocation2 + $0x60] sm:$0xff] 0.0
    %32 = vst [vmem:[#allocation2 + $0x68] sm:$0xff] 0.0
    %33 = vst [vmem:[#allocation2 + $0x70] sm:$0xff] 0.0
    %34 = vst [vmem:[#allocation2 + $0x78] sm:$0xff] 0.0
    %35 = vst [vmem:[#allocation2 + $0x80] sm:$0xff] 0.0
    %36 = vst [vmem:[#allocation2 + $0x88] sm:$0xff] 0.0
    %37 = vst [vmem:[#allocation2 + $0x90] sm:$0xff] 0.0
    %38 = vst [vmem:[#allocation2 + $0x98] sm:$0xff] 0.0
    %39 = vst [vmem:[#allocation2 + $0xa0] sm:$0xff] 0.0
    %40 = vst [vmem:[#allocation2 + $0xa8] sm:$0xff] 0.0
    %41 = vst [vmem:[#allocation2 + $0xb0] sm:$0xff] 0.0
    %42 = vst [vmem:[#allocation2 + $0xb8] sm:$0xff] 0.0
    %43 = vst [vmem:[#allocation2 + $0xc0] sm:$0xff] 0.0
    %44 = vst [vmem:[#allocation2 + $0xc8] sm:$0xff] 0.0
    %45 = vst [vmem:[#allocation2 + $0xd0] sm:$0xff] 0.0
    %46 = vst [vmem:[#allocation2 + $0xd8] sm:$0xff] 0.0
    %47 = vst [vmem:[#allocation2 + $0xe0] sm:$0xff] 0.0
    %48 = vst [vmem:[#allocation2 + $0xe8] sm:$0xff] 0.0
    %49 = vst [vmem:[#allocation2 + $0xf0] sm:$0xff] 0.0
    %50 = vst [vmem:[#allocation2 + $0xf8] sm:$0xff] 0.0
  $region17: #{sgc_forward.4} parent=0 // pred_fallthru
    _
  %v51 = vld [vmem:[#allocation2] sm:$0xff]
  %v52 = vld [vmem:[#allocation2 + $0x8] sm:$0xff]
  %v53 = vld [vmem:[#allocation2 + $0x10] sm:$0xff]
  %v54 = vld [vmem:[#allocation2 + $0x18] sm:$0xff]
  %v55 = vld [vmem:[#allocation2 + $0x20] sm:$0xff]
  %v56 = vld [vmem:[#allocation2 + $0x28] sm:$0xff]
  %v57 = vld [vmem:[#allocation2 + $0x30] sm:$0xff]
  %v58 = vld [vmem:[#allocation2 + $0x38] sm:$0xff]
  %v59 = vld [vmem:[#allocation2 + $0x40] sm:$0xff]
  %v60 = vld [vmem:[#allocation2 + $0x48] sm:$0xff]
  %v61 = vld [vmem:[#allocation2 + $0x50] sm:$0xff]
  %v62 = vld [vmem:[#allocation2 + $0x58] sm:$0xff]
  %v63 = vld [vmem:[#allocation2 + $0x60] sm:$0xff]
  %v64 = vld [vmem:[#allocation2 + $0x68] sm:$0xff]
  %v65 = vld [vmem:[#allocation2 + $0x70] sm:$0xff]
  %v66 = vld [vmem:[#allocation2 + $0x78] sm:$0xff]
  %v67 = vld [vmem:[#allocation2 + $0x80] sm:$0xff]
  %v68 = vld [vmem:[#allocation2 + $0x88] sm:$0xff]
  %v69 = vld [vmem:[#allocation2 + $0x90] sm:$0xff]
  %v70 = vld [vmem:[#allocation2 + $0x98] sm:$0xff]
  %v71 = vld [vmem:[#allocation2 + $0xa0] sm:$0xff]
  %v72 = vld [vmem:[#allocation2 + $0xa8] sm:$0xff]
  %v73 = vld [vmem:[#allocation2 + $0xb0] sm:$0xff]
  %v74 = vld [vmem:[#allocation2 + $0xb8] sm:$0xff]
  %v75 = vld [vmem:[#allocation2 + $0xc0] sm:$0xff]
  %v76 = vld [vmem:[#allocation2 + $0xc8] sm:$0xff]
  %v77 = vld [vmem:[#allocation2 + $0xd0] sm:$0xff]
  %v78 = vld [vmem:[#allocation2 + $0xd8] sm:$0xff]
  %v79 = vld [vmem:[#allocation2 + $0xe0] sm:$0xff]
  %v80 = vld [vmem:[#allocation2 + $0xe8] sm:$0xff]
  %v81 = vld [vmem:[#allocation2 + $0xf0] sm:$0xff]
  %v82 = vld [vmem:[#allocation2 + $0xf8] sm:$0xff]
  %v83 = vld [vmem:[%s0] sm:$0xff]
  %v84 = vld [vmem:[%s0 + $0x8] sm:$0xff]
  %v85 = vld [vmem:[%s0 + $0x10] sm:$0xff]
  %v86 = vld [vmem:[%s0 + $0x18] sm:$0xff]
  %v87 = vld [vmem:[%s0 + $0x20] sm:$0xff]
  %v88 = vld [vmem:[%s0 + $0x28] sm:$0xff]
  %v89 = vld [vmem:[%s0 + $0x30] sm:$0xff]
  %v90 = vld [vmem:[%s0 + $0x38] sm:$0xff]
  %v91 = vld [vmem:[%s0 + $0x40] sm:$0xff]
  %v92 = vld [vmem:[%s0 + $0x48] sm:$0xff]
  %v93 = vld [vmem:[%s0 + $0x50] sm:$0xff]
  %v94 = vld [vmem:[%s0 + $0x58] sm:$0xff]
  %v95 = vld [vmem:[%s0 + $0x60] sm:$0xff]
  %v96 = vld [vmem:[%s0 + $0x68] sm:$0xff]
  %v97 = vld [vmem:[%s0 + $0x70] sm:$0xff]
  %v98 = vld [vmem:[%s0 + $0x78] sm:$0xff]
  %v99 = vld [vmem:[%s0 + $0x80] sm:$0xff]
  %v100 = vld [vmem:[%s0 + $0x88] sm:$0xff]
  %v101 = vld [vmem:[%s0 + $0x90] sm:$0xff]
  %v102 = vld [vmem:[%s0 + $0x98] sm:$0xff]
  %v103 = vld [vmem:[%s0 + $0xa0] sm:$0xff]
  %v104 = vld [vmem:[%s0 + $0xa8] sm:$0xff]
  %v105 = vld [vmem:[%s0 + $0xb0] sm:$0xff]
  %v106 = vld [vmem:[%s0 + $0xb8] sm:$0xff]
  %v107 = vld [vmem:[%s0 + $0xc0] sm:$0xff]
  %v108 = vld [vmem:[%s0 + $0xc8] sm:$0xff]
  %v109 = vld [vmem:[%s0 + $0xd0] sm:$0xff]
  %v110 = vld [vmem:[%s0 + $0xd8] sm:$0xff]
  %v111 = vld [vmem:[%s0 + $0xe0] sm:$0xff]
  %v112 = vld [vmem:[%s0 + $0xe8] sm:$0xff]
  %v113 = vld [vmem:[%s0 + $0xf0] sm:$0xff]
  %v114 = vld [vmem:[%s0 + $0xf8] sm:$0xff]
  %v115 = vld [vmem:[%s1] sm:$0xf]
  %v116 = vld [vmem:[%s1 + $0x4] sm:$0xf]
  %v117 = vld [vmem:[%s1 + $0x8] sm:$0xf]
  %v118 = vld [vmem:[%s1 + $0xc] sm:$0xf]
  %v119 = vld [vmem:[%s1 + $0x10] sm:$0xf]
  %v120 = vld [vmem:[%s1 + $0x14] sm:$0xf]
  %v121 = vld [vmem:[%s1 + $0x18] sm:$0xf]
  %v122 = vld [vmem:[%s1 + $0x1c] sm:$0xf]
  %v123 = vld [vmem:[%s1 + $0x20] sm:$0xf]
  %v124 = vld [vmem:[%s1 + $0x24] sm:$0xf]
  %v125 = vld [vmem:[%s1 + $0x28] sm:$0xf]
  %v126 = vld [vmem:[%s1 + $0x2c] sm:$0xf]
  %v127 = vld [vmem:[%s1 + $0x30] sm:$0xf]
  %v128 = vld [vmem:[%s1 + $0x34] sm:$0xf]
  %v129 = vld [vmem:[%s1 + $0x38] sm:$0xf]
  %v130 = vld [vmem:[%s1 + $0x3c] sm:$0xf]
  %v131 = vld [vmem:[%s1 + $0x40] sm:$0xf]
  %v132 = vld [vmem:[%s1 + $0x44] sm:$0xf]
  %v133 = vld [vmem:[%s1 + $0x48] sm:$0xf]
  %v134 = vld [vmem:[%s1 + $0x4c] sm:$0xf]
  %v135 = vld [vmem:[%s1 + $0x50] sm:$0xf]
  %v136 = vld [vmem:[%s1 + $0x54] sm:$0xf]
  %v137 = vld [vmem:[%s1 + $0x58] sm:$0xf]
  %v138 = vld [vmem:[%s1 + $0x5c] sm:$0xf]
  %v139 = vld [vmem:[%s1 + $0x60] sm:$0xf]
  %v140 = vld [vmem:[%s1 + $0x64] sm:$0xf]
  %v141 = vld [vmem:[%s1 + $0x68] sm:$0xf]
  %v142 = vld [vmem:[%s1 + $0x6c] sm:$0xf]
  %v143 = vld [vmem:[%s1 + $0x70] sm:$0xf]
  %v144 = vld [vmem:[%s1 + $0x74] sm:$0xf]
  %v145 = vld [vmem:[%s1 + $0x78] sm:$0xf]
  %v146 = vld [vmem:[%s1 + $0x7c] sm:$0xf]
  %v179 = vunpack.c.l.b16 %v83
  %v180 = vunpack.c.h.b16 %v83
  %v181 = vunpack.c.l.b16 %v84
  %v182 = vunpack.c.h.b16 %v84
  %v183 = vunpack.c.l.b16 %v85
  %v184 = vunpack.c.h.b16 %v85
  %v185 = vunpack.c.l.b16 %v86
  %v186 = vunpack.c.h.b16 %v86
  %v187 = vunpack.c.l.b16 %v87
  %v188 = vunpack.c.h.b16 %v87
  %v189 = vunpack.c.l.b16 %v88
  %v190 = vunpack.c.h.b16 %v88
  %v191 = vunpack.c.l.b16 %v89
  %v192 = vunpack.c.h.b16 %v89
  %v193 = vunpack.c.l.b16 %v90
  %v194 = vunpack.c.h.b16 %v90
  %v195 = vunpack.c.l.b16 %v91
  %v196 = vunpack.c.h.b16 %v91
  %v197 = vunpack.c.l.b16 %v92
  %v198 = vunpack.c.h.b16 %v92
  %v199 = vunpack.c.l.b16 %v93
  %v200 = vunpack.c.h.b16 %v93
  %v201 = vunpack.c.l.b16 %v94
  %v202 = vunpack.c.h.b16 %v94
  %v203 = vunpack.c.l.b16 %v95
  %v204 = vunpack.c.h.b16 %v95
  %v205 = vunpack.c.l.b16 %v96
  %v206 = vunpack.c.h.b16 %v96
  %v207 = vunpack.c.l.b16 %v97
  %v208 = vunpack.c.h.b16 %v97
  %v209 = vunpack.c.l.b16 %v98
  %v210 = vunpack.c.h.b16 %v98
  %v211 = vunpack.c.l.b16 %v99
  %v212 = vunpack.c.h.b16 %v99
  %v213 = vunpack.c.l.b16 %v100
  %v214 = vunpack.c.h.b16 %v100
  %v215 = vunpack.c.l.b16 %v101
  %v216 = vunpack.c.h.b16 %v101
  %v217 = vunpack.c.l.b16 %v102
  %v218 = vunpack.c.h.b16 %v102
  %v219 = vunpack.c.l.b16 %v103
  %v220 = vunpack.c.h.b16 %v103
  %v221 = vunpack.c.l.b16 %v104
  %v222 = vunpack.c.h.b16 %v104
  %v223 = vunpack.c.l.b16 %v105
  %v224 = vunpack.c.h.b16 %v105
  %v225 = vunpack.c.l.b16 %v106
  %v226 = vunpack.c.h.b16 %v106
  %v227 = vunpack.c.l.b16 %v107
  %v228 = vunpack.c.h.b16 %v107
  %v229 = vunpack.c.l.b16 %v108
  %v230 = vunpack.c.h.b16 %v108
  %v231 = vunpack.c.l.b16 %v109
  %v232 = vunpack.c.h.b16 %v109
  %v233 = vunpack.c.l.b16 %v110
  %v234 = vunpack.c.h.b16 %v110
  %v235 = vunpack.c.l.b16 %v111
  %v236 = vunpack.c.h.b16 %v111
  %v237 = vunpack.c.l.b16 %v112
  %v238 = vunpack.c.h.b16 %v112
  %v239 = vunpack.c.l.b16 %v113
  %v240 = vunpack.c.h.b16 %v113
  %v241 = vunpack.c.l.b16 %v114
  %v242 = vunpack.c.h.b16 %v114
  %v243 = vpack.c.b16 %v181, %v179
  %v244 = vpack.c.b16 %v182, %v180
  %v245 = vpack.c.b16 %v185, %v183
  %v246 = vpack.c.b16 %v186, %v184
  %v247 = vpack.c.b16 %v189, %v187
  %v248 = vpack.c.b16 %v190, %v188
  %v249 = vpack.c.b16 %v193, %v191
  %v250 = vpack.c.b16 %v194, %v192
  %v251 = vpack.c.b16 %v197, %v195
  %v252 = vpack.c.b16 %v198, %v196
  %v253 = vpack.c.b16 %v201, %v199
  %v254 = vpack.c.b16 %v202, %v200
  %v255 = vpack.c.b16 %v205, %v203
  %v256 = vpack.c.b16 %v206, %v204
  %v257 = vpack.c.b16 %v209, %v207
  %v258 = vpack.c.b16 %v210, %v208
  %v259 = vpack.c.b16 %v213, %v211
  %v260 = vpack.c.b16 %v214, %v212
  %v261 = vpack.c.b16 %v217, %v215
  %v262 = vpack.c.b16 %v218, %v216
  %v263 = vpack.c.b16 %v221, %v219
  %v264 = vpack.c.b16 %v222, %v220
  %v265 = vpack.c.b16 %v225, %v223
  %v266 = vpack.c.b16 %v226, %v224
  %v267 = vpack.c.b16 %v229, %v227
  %v268 = vpack.c.b16 %v230, %v228
  %v269 = vpack.c.b16 %v233, %v231
  %v270 = vpack.c.b16 %v234, %v232
  %v271 = vpack.c.b16 %v237, %v235
  %v272 = vpack.c.b16 %v238, %v236
  %v273 = vpack.c.b16 %v241, %v239
  %v274 = vpack.c.b16 %v242, %v240
  %v339 = vunpack.c.l.b16 %v115
  %v340 = vunpack.c.l.b16 %v116
  %v341 = vunpack.c.l.b16 %v117
  %v342 = vunpack.c.l.b16 %v118
  %v343 = vunpack.c.l.b16 %v119
  %v344 = vunpack.c.l.b16 %v120
  %v345 = vunpack.c.l.b16 %v121
  %v346 = vunpack.c.l.b16 %v122
  %v347 = vunpack.c.l.b16 %v123
  %v348 = vunpack.c.l.b16 %v124
  %v349 = vunpack.c.l.b16 %v125
  %v350 = vunpack.c.l.b16 %v126
  %v351 = vunpack.c.l.b16 %v127
  %v352 = vunpack.c.l.b16 %v128
  %v353 = vunpack.c.l.b16 %v129
  %v354 = vunpack.c.l.b16 %v130
  %v355 = vunpack.c.l.b16 %v131
  %v356 = vunpack.c.l.b16 %v132
  %v357 = vunpack.c.l.b16 %v133
  %v358 = vunpack.c.l.b16 %v134
  %v359 = vunpack.c.l.b16 %v135
  %v360 = vunpack.c.l.b16 %v136
  %v361 = vunpack.c.l.b16 %v137
  %v362 = vunpack.c.l.b16 %v138
  %v363 = vunpack.c.l.b16 %v139
  %v364 = vunpack.c.l.b16 %v140
  %v365 = vunpack.c.l.b16 %v141
  %v366 = vunpack.c.l.b16 %v142
  %v367 = vunpack.c.l.b16 %v143
  %v368 = vunpack.c.l.b16 %v144
  %v369 = vunpack.c.l.b16 %v145
  %v370 = vunpack.c.l.b16 %v146
  %v371 = vpack.c.b16 %v340, %v339
  %v372 = vpack.c.b16 %v342, %v341
  %v373 = vpack.c.b16 %v344, %v343
  %v374 = vpack.c.b16 %v346, %v345
  %v375 = vpack.c.b16 %v348, %v347
  %v376 = vpack.c.b16 %v350, %v349
  %v377 = vpack.c.b16 %v352, %v351
  %v378 = vpack.c.b16 %v354, %v353
  %v379 = vpack.c.b16 %v356, %v355
  %v380 = vpack.c.b16 %v358, %v357
  %v381 = vpack.c.b16 %v360, %v359
  %v382 = vpack.c.b16 %v362, %v361
  %v383 = vpack.c.b16 %v364, %v363
  %v384 = vpack.c.b16 %v366, %v365
  %v385 = vpack.c.b16 %v368, %v367
  %v386 = vpack.c.b16 %v370, %v369
  %403 = vmatprep.subr.bf16.mxu0 0
  %404 = vmatpush1.bf16.msra.mxu0 %v371
  %405 = vmatprep.subr.bf16.mxu0 0
  %406 = vmatpush1.bf16.msra.mxu0 %v372
  %407 = vmatprep.subr.bf16.mxu0 0
  %408 = vmatpush1.bf16.msra.mxu0 %v373
  %409 = vmatprep.subr.bf16.mxu0 0
  %410 = vmatpush1.bf16.msra.mxu0 %v374
  %411 = vmatprep.subr.bf16.mxu0 0
  %412 = vmatpush1.bf16.msra.mxu0 %v375
  %413 = vmatprep.subr.bf16.mxu0 0
  %414 = vmatpush1.bf16.msra.mxu0 %v376
  %415 = vmatprep.subr.bf16.mxu0 0
  %416 = vmatpush1.bf16.msra.mxu0 %v377
  %417 = vmatprep.subr.bf16.mxu0 0
  %418 = vmatpush1.bf16.msra.mxu0 %v378
  %419 = vmatprep.subr.bf16.mxu0 0
  %420 = vmatpush1.bf16.msra.mxu0 %v379
  %421 = vmatprep.subr.bf16.mxu0 0
  %422 = vmatpush1.bf16.msra.mxu0 %v380
  %423 = vmatprep.subr.bf16.mxu0 0
  %424 = vmatpush1.bf16.msra.mxu0 %v381
  %425 = vmatprep.subr.bf16.mxu0 0
  %426 = vmatpush1.bf16.msra.mxu0 %v382
  %427 = vmatprep.subr.bf16.mxu0 0
  %428 = vmatpush1.bf16.msra.mxu0 %v383
  %429 = vmatprep.subr.bf16.mxu0 0
  %430 = vmatpush1.bf16.msra.mxu0 %v384
  %431 = vmatprep.subr.bf16.mxu0 0
  %432 = vmatpush1.bf16.msra.mxu0 %v385
  %433 = vmatprep.subr.bf16.mxu0 0
  %434 = vmatpush1.bf16.msra.mxu0 %v386
  %435 = vmatprep.mubr.bf16.mxu0 %v244
  %436 = vmatmul.mubr.bf16.gmra.mrb[0].mxu0 %v243
  %v437 = vpop.f32.mrb[0].mxu0
  %v438 = vadd.f32 0.0, %v437
  %v439 = vpop.f32.mrb[0].mxu0
  %v440 = vpop.f32.mrb[0].mxu0
  %v441 = vadd.f32 0.0, %v440
  %v442 = vpop.f32.mrb[0].mxu0
  %443 = vmatprep.mubr.bf16.mxu0 %v246
  %444 = vmatmul.mubr.bf16.gmra.mrb[0].mxu0 %v245
  %v445 = vpop.f32.mrb[0].mxu0
  %v446 = vadd.f32 0.0, %v445
  %v447 = vpop.f32.mrb[0].mxu0
  %v448 = vpop.f32.mrb[0].mxu0
  %v449 = vadd.f32 0.0, %v448
  %v450 = vpop.f32.mrb[0].mxu0
  %451 = vmatprep.mubr.bf16.mxu0 %v248
  %452 = vmatmul.mubr.bf16.gmra.mrb[0].mxu0 %v247
  %v453 = vpop.f32.mrb[0].mxu0
  %v454 = vadd.f32 0.0, %v453
  %v455 = vpop.f32.mrb[0].mxu0
  %v456 = vpop.f32.mrb[0].mxu0
  %v457 = vadd.f32 0.0, %v456
  %v458 = vpop.f32.mrb[0].mxu0
  %459 = vmatprep.mubr.bf16.mxu0 %v250
  %460 = vmatmul.mubr.bf16.gmra.mrb[0].mxu0 %v249
  %v461 = vpop.f32.mrb[0].mxu0
  %v462 = vadd.f32 0.0, %v461
  %v463 = vpop.f32.mrb[0].mxu0
  %v464 = vpop.f32.mrb[0].mxu0
  %v465 = vadd.f32 0.0, %v464
  %v466 = vpop.f32.mrb[0].mxu0
  %467 = vmatprep.mubr.bf16.mxu0 %v252
  %468 = vmatmul.mubr.bf16.gmra.mrb[0].mxu0 %v251
  %v469 = vpop.f32.mrb[0].mxu0
  %v470 = vadd.f32 0.0, %v469
  %v471 = vpop.f32.mrb[0].mxu0
  %v472 = vpop.f32.mrb[0].mxu0
  %v473 = vadd.f32 0.0, %v472
  %v474 = vpop.f32.mrb[0].mxu0
  %475 = vmatprep.mubr.bf16.mxu0 %v254
  %476 = vmatmul.mubr.bf16.gmra.mrb[0].mxu0 %v253
  %v477 = vpop.f32.mrb[0].mxu0
  %v478 = vadd.f32 0.0, %v477
  %v479 = vpop.f32.mrb[0].mxu0
  %v480 = vpop.f32.mrb[0].mxu0
  %v481 = vadd.f32 0.0, %v480
  %v482 = vpop.f32.mrb[0].mxu0
  %483 = vmatprep.mubr.bf16.mxu0 %v256
  %484 = vmatmul.mubr.bf16.gmra.mrb[0].mxu0 %v255
  %v485 = vpop.f32.mrb[0].mxu0
  %v486 = vadd.f32 0.0, %v485
  %v487 = vpop.f32.mrb[0].mxu0
  %v488 = vpop.f32.mrb[0].mxu0
  %v489 = vadd.f32 0.0, %v488
  %v490 = vpop.f32.mrb[0].mxu0
  %491 = vmatprep.mubr.bf16.mxu0 %v258
  %492 = vmatmul.mubr.bf16.gmra.mrb[0].mxu0 %v257
  %v493 = vpop.f32.mrb[0].mxu0
  %v494 = vadd.f32 0.0, %v493
  %v495 = vpop.f32.mrb[0].mxu0
  %v496 = vpop.f32.mrb[0].mxu0
  %v497 = vadd.f32 0.0, %v496
  %v498 = vpop.f32.mrb[0].mxu0
  %499 = vmatprep.mubr.bf16.mxu0 %v260
  %500 = vmatmul.mubr.bf16.gmra.mrb[0].mxu0 %v259
  %v501 = vpop.f32.mrb[0].mxu0
  %v502 = vadd.f32 0.0, %v501
  %v503 = vpop.f32.mrb[0].mxu0
  %v504 = vpop.f32.mrb[0].mxu0
  %v505 = vadd.f32 0.0, %v504
  %v506 = vpop.f32.mrb[0].mxu0
  %507 = vmatprep.mubr.bf16.mxu0 %v262
  %508 = vmatmul.mubr.bf16.gmra.mrb[0].mxu0 %v261
  %v509 = vpop.f32.mrb[0].mxu0
  %v510 = vadd.f32 0.0, %v509
  %v511 = vpop.f32.mrb[0].mxu0
  %v512 = vpop.f32.mrb[0].mxu0
  %v513 = vadd.f32 0.0, %v512
  %v514 = vpop.f32.mrb[0].mxu0
  %515 = vmatprep.mubr.bf16.mxu0 %v264
  %516 = vmatmul.mubr.bf16.gmra.mrb[0].mxu0 %v263
  %v517 = vpop.f32.mrb[0].mxu0
  %v518 = vadd.f32 0.0, %v517
  %v519 = vpop.f32.mrb[0].mxu0
  %v520 = vpop.f32.mrb[0].mxu0
  %v521 = vadd.f32 0.0, %v520
  %v522 = vpop.f32.mrb[0].mxu0
  %523 = vmatprep.mubr.bf16.mxu0 %v266
  %524 = vmatmul.mubr.bf16.gmra.mrb[0].mxu0 %v265
  %v525 = vpop.f32.mrb[0].mxu0
  %v526 = vadd.f32 0.0, %v525
  %v527 = vpop.f32.mrb[0].mxu0
  %v528 = vpop.f32.mrb[0].mxu0
  %v529 = vadd.f32 0.0, %v528
  %v530 = vpop.f32.mrb[0].mxu0
  %531 = vmatprep.mubr.bf16.mxu0 %v268
  %532 = vmatmul.mubr.bf16.gmra.mrb[0].mxu0 %v267
  %v533 = vpop.f32.mrb[0].mxu0
  %v534 = vadd.f32 0.0, %v533
  %v535 = vpop.f32.mrb[0].mxu0
  %v536 = vpop.f32.mrb[0].mxu0
  %v537 = vadd.f32 0.0, %v536
  %v538 = vpop.f32.mrb[0].mxu0
  %539 = vmatprep.mubr.bf16.mxu0 %v270
  %540 = vmatmul.mubr.bf16.gmra.mrb[0].mxu0 %v269
  %v541 = vpop.f32.mrb[0].mxu0
  %v542 = vadd.f32 0.0, %v541
  %v543 = vpop.f32.mrb[0].mxu0
  %v544 = vpop.f32.mrb[0].mxu0
  %v545 = vadd.f32 0.0, %v544
  %v546 = vpop.f32.mrb[0].mxu0
  %547 = vmatprep.mubr.bf16.mxu0 %v272
  %548 = vmatmul.mubr.bf16.gmra.mrb[0].mxu0 %v271
  %v549 = vpop.f32.mrb[0].mxu0
  %v550 = vadd.f32 0.0, %v549
  %v551 = vpop.f32.mrb[0].mxu0
  %v552 = vpop.f32.mrb[0].mxu0
  %v553 = vadd.f32 0.0, %v552
  %v554 = vpop.f32.mrb[0].mxu0
  %555 = vmatprep.mubr.bf16.mxu0 %v274
  %556 = vmatmul.mubr.bf16.gmra.mrb[0].mxu0 %v273
  %v557 = vpop.f32.mrb[0].mxu0
  %v558 = vadd.f32 0.0, %v557
  %v559 = vpop.f32.mrb[0].mxu0
  %v560 = vpop.f32.mrb[0].mxu0
  %v561 = vadd.f32 0.0, %v560
  %v562 = vpop.f32.mrb[0].mxu0
  %563 = vdwg.mxu0
  %v564 = vadd.f32 %v51, %v438
  %v565 = vadd.f32 %v52, %v441
  %v566 = vadd.f32 %v53, %v446
  %v567 = vadd.f32 %v54, %v449
  %v568 = vadd.f32 %v55, %v454
  %v569 = vadd.f32 %v56, %v457
  %v570 = vadd.f32 %v57, %v462
  %v571 = vadd.f32 %v58, %v465
  %v572 = vadd.f32 %v59, %v470
  %v573 = vadd.f32 %v60, %v473
  %v574 = vadd.f32 %v61, %v478
  %v575 = vadd.f32 %v62, %v481
  %v576 = vadd.f32 %v63, %v486
  %v577 = vadd.f32 %v64, %v489
  %v578 = vadd.f32 %v65, %v494
  %v579 = vadd.f32 %v66, %v497
  %v580 = vadd.f32 %v67, %v502
  %v581 = vadd.f32 %v68, %v505
  %v582 = vadd.f32 %v69, %v510
  %v583 = vadd.f32 %v70, %v513
  %v584 = vadd.f32 %v71, %v518
  %v585 = vadd.f32 %v72, %v521
  %v586 = vadd.f32 %v73, %v526
  %v587 = vadd.f32 %v74, %v529
  %v588 = vadd.f32 %v75, %v534
  %v589 = vadd.f32 %v76, %v537
  %v590 = vadd.f32 %v77, %v542
  %v591 = vadd.f32 %v78, %v545
  %v592 = vadd.f32 %v79, %v550
  %v593 = vadd.f32 %v80, %v553
  %v594 = vadd.f32 %v81, %v558
  %v595 = vadd.f32 %v82, %v561
  %596 = vst [vmem:[#allocation2] sm:$0xff] %v564
  %597 = vst [vmem:[#allocation2 + $0x8] sm:$0xff] %v565
  %598 = vst [vmem:[#allocation2 + $0x10] sm:$0xff] %v566
  %599 = vst [vmem:[#allocation2 + $0x18] sm:$0xff] %v567
  %600 = vst [vmem:[#allocation2 + $0x20] sm:$0xff] %v568
  %601 = vst [vmem:[#allocation2 + $0x28] sm:$0xff] %v569
  %602 = vst [vmem:[#allocation2 + $0x30] sm:$0xff] %v570
  %603 = vst [vmem:[#allocation2 + $0x38] sm:$0xff] %v571
  %604 = vst [vmem:[#allocation2 + $0x40] sm:$0xff] %v572
  %605 = vst [vmem:[#allocation2 + $0x48] sm:$0xff] %v573
  %606 = vst [vmem:[#allocation2 + $0x50] sm:$0xff] %v574
  %607 = vst [vmem:[#allocation2 + $0x58] sm:$0xff] %v575
  %608 = vst [vmem:[#allocation2 + $0x60] sm:$0xff] %v576
  %609 = vst [vmem:[#allocation2 + $0x68] sm:$0xff] %v577
  %610 = vst [vmem:[#allocation2 + $0x70] sm:$0xff] %v578
  %611 = vst [vmem:[#allocation2 + $0x78] sm:$0xff] %v579
  %612 = vst [vmem:[#allocation2 + $0x80] sm:$0xff] %v580
  %613 = vst [vmem:[#allocation2 + $0x88] sm:$0xff] %v581
  %614 = vst [vmem:[#allocation2 + $0x90] sm:$0xff] %v582
  %615 = vst [vmem:[#allocation2 + $0x98] sm:$0xff] %v583
  %616 = vst [vmem:[#allocation2 + $0xa0] sm:$0xff] %v584
  %617 = vst [vmem:[#allocation2 + $0xa8] sm:$0xff] %v585
  %618 = vst [vmem:[#allocation2 + $0xb0] sm:$0xff] %v586
  %619 = vst [vmem:[#allocation2 + $0xb8] sm:$0xff] %v587
  %620 = vst [vmem:[#allocation2 + $0xc0] sm:$0xff] %v588
  %621 = vst [vmem:[#allocation2 + $0xc8] sm:$0xff] %v589
  %622 = vst [vmem:[#allocation2 + $0xd0] sm:$0xff] %v590
  %623 = vst [vmem:[#allocation2 + $0xd8] sm:$0xff] %v591
  %624 = vst [vmem:[#allocation2 + $0xe0] sm:$0xff] %v592
  %625 = vst [vmem:[#allocation2 + $0xe8] sm:$0xff] %v593
  %626 = vst [vmem:[#allocation2 + $0xf0] sm:$0xff] %v594
  %627 = vst [vmem:[#allocation2 + $0xf8] sm:$0xff] %v595
  // Predicated region
  $region18: #{sgc_forward.4} parent=0 // pred_check
    %p628 = pneg %p15
  $region19: #{sgc_forward.4} parent=0 // pred_check_branch
    %630 = sbr.rel (%p628) target = $region21
  $region20: #{sgc_forward.4} parent=0 // pred_region
    %v631 = vld [vmem:[#allocation2] sm:$0xff]
    %v632 = vld [vmem:[#allocation2 + $0x8] sm:$0xff]
    %v633 = vld [vmem:[#allocation2 + $0x10] sm:$0xff]
    %v634 = vld [vmem:[#allocation2 + $0x18] sm:$0xff]
    %v635 = vld [vmem:[#allocation2 + $0x20] sm:$0xff]
    %v636 = vld [vmem:[#allocation2 + $0x28] sm:$0xff]
    %v637 = vld [vmem:[#allocation2 + $0x30] sm:$0xff]
    %v638 = vld [vmem:[#allocation2 + $0x38] sm:$0xff]
    %v639 = vld [vmem:[#allocation2 + $0x40] sm:$0xff]
    %v640 = vld [vmem:[#allocation2 + $0x48] sm:$0xff]
    %v641 = vld [vmem:[#allocation2 + $0x50] sm:$0xff]
    %v642 = vld [vmem:[#allocation2 + $0x58] sm:$0xff]
    %v643 = vld [vmem:[#allocation2 + $0x60] sm:$0xff]
    %v644 = vld [vmem:[#allocation2 + $0x68] sm:$0xff]
    %v645 = vld [vmem:[#allocation2 + $0x70] sm:$0xff]
    %v646 = vld [vmem:[#allocation2 + $0x78] sm:$0xff]
    %v647 = vld [vmem:[#allocation2 + $0x80] sm:$0xff]
    %v648 = vld [vmem:[#allocation2 + $0x88] sm:$0xff]
    %v649 = vld [vmem:[#allocation2 + $0x90] sm:$0xff]
    %v650 = vld [vmem:[#allocation2 + $0x98] sm:$0xff]
    %v651 = vld [vmem:[#allocation2 + $0xa0] sm:$0xff]
    %v652 = vld [vmem:[#allocation2 + $0xa8] sm:$0xff]
    %v653 = vld [vmem:[#allocation2 + $0xb0] sm:$0xff]
    %v654 = vld [vmem:[#allocation2 + $0xb8] sm:$0xff]
    %v655 = vld [vmem:[#allocation2 + $0xc0] sm:$0xff]
    %v656 = vld [vmem:[#allocation2 + $0xc8] sm:$0xff]
    %v657 = vld [vmem:[#allocation2 + $0xd0] sm:$0xff]
    %v658 = vld [vmem:[#allocation2 + $0xd8] sm:$0xff]
    %v659 = vld [vmem:[#allocation2 + $0xe0] sm:$0xff]
    %v660 = vld [vmem:[#allocation2 + $0xe8] sm:$0xff]
    %v661 = vld [vmem:[#allocation2 + $0xf0] sm:$0xff]
    %v662 = vld [vmem:[#allocation2 + $0xf8] sm:$0xff]
    %v663 = vpack.c.bf16 %v632, %v631
    %v664 = vpack.c.bf16 %v634, %v633
    %v665 = vpack.c.bf16 %v636, %v635
    %v666 = vpack.c.bf16 %v638, %v637
    %v667 = vpack.c.bf16 %v640, %v639
    %v668 = vpack.c.bf16 %v642, %v641
    %v669 = vpack.c.bf16 %v644, %v643
    %v670 = vpack.c.bf16 %v646, %v645
    %v671 = vpack.c.bf16 %v648, %v647
    %v672 = vpack.c.bf16 %v650, %v649
    %v673 = vpack.c.bf16 %v652, %v651
    %v674 = vpack.c.bf16 %v654, %v653
    %v675 = vpack.c.bf16 %v656, %v655
    %v676 = vpack.c.bf16 %v658, %v657
    %v677 = vpack.c.bf16 %v660, %v659
    %v678 = vpack.c.bf16 %v662, %v661
    %v695 = vunpack.c.l.b16 %v663
    %v696 = vunpack.c.h.b16 %v663
    %v697 = vunpack.c.l.b16 %v664
    %v698 = vunpack.c.h.b16 %v664
    %v699 = vunpack.c.l.b16 %v665
    %v700 = vunpack.c.h.b16 %v665
    %v701 = vunpack.c.l.b16 %v666
    %v702 = vunpack.c.h.b16 %v666
    %v703 = vunpack.c.l.b16 %v667
    %v704 = vunpack.c.h.b16 %v667
    %v705 = vunpack.c.l.b16 %v668
    %v706 = vunpack.c.h.b16 %v668
    %v707 = vunpack.c.l.b16 %v669
    %v708 = vunpack.c.h.b16 %v669
    %v709 = vunpack.c.l.b16 %v670
    %v710 = vunpack.c.h.b16 %v670
    %v711 = vunpack.c.l.b16 %v671
    %v712 = vunpack.c.h.b16 %v671
    %v713 = vunpack.c.l.b16 %v672
    %v714 = vunpack.c.h.b16 %v672
    %v715 = vunpack.c.l.b16 %v673
    %v716 = vunpack.c.h.b16 %v673
    %v717 = vunpack.c.l.b16 %v674
    %v718 = vunpack.c.h.b16 %v674
    %v719 = vunpack.c.l.b16 %v675
    %v720 = vunpack.c.h.b16 %v675
    %v721 = vunpack.c.l.b16 %v676
    %v722 = vunpack.c.h.b16 %v676
    %v723 = vunpack.c.l.b16 %v677
    %v724 = vunpack.c.h.b16 %v677
    %v725 = vunpack.c.l.b16 %v678
    %v726 = vunpack.c.h.b16 %v678
    %v727 = vpack.c.b16 %v695, %v695
    %v728 = vpack.c.b16 %v696, %v696
    %v729 = vpack.c.b16 %v697, %v697
    %v730 = vpack.c.b16 %v698, %v698
    %v731 = vpack.c.b16 %v699, %v699
    %v732 = vpack.c.b16 %v700, %v700
    %v733 = vpack.c.b16 %v701, %v701
    %v734 = vpack.c.b16 %v702, %v702
    %v735 = vpack.c.b16 %v703, %v703
    %v736 = vpack.c.b16 %v704, %v704
    %v737 = vpack.c.b16 %v705, %v705
    %v738 = vpack.c.b16 %v706, %v706
    %v739 = vpack.c.b16 %v707, %v707
    %v740 = vpack.c.b16 %v708, %v708
    %v741 = vpack.c.b16 %v709, %v709
    %v742 = vpack.c.b16 %v710, %v710
    %v743 = vpack.c.b16 %v711, %v711
    %v744 = vpack.c.b16 %v712, %v712
    %v745 = vpack.c.b16 %v713, %v713
    %v746 = vpack.c.b16 %v714, %v714
    %v747 = vpack.c.b16 %v715, %v715
    %v748 = vpack.c.b16 %v716, %v716
    %v749 = vpack.c.b16 %v717, %v717
    %v750 = vpack.c.b16 %v718, %v718
    %v751 = vpack.c.b16 %v719, %v719
    %v752 = vpack.c.b16 %v720, %v720
    %v753 = vpack.c.b16 %v721, %v721
    %v754 = vpack.c.b16 %v722, %v722
    %v755 = vpack.c.b16 %v723, %v723
    %v756 = vpack.c.b16 %v724, %v724
    %v757 = vpack.c.b16 %v725, %v725
    %v758 = vpack.c.b16 %v726, %v726
    %791 = vst [vmem:[%s3] sm:$0xf] %v727
    %792 = vst [vmem:[%s3 + $0x4] sm:$0xf] %v728
    %793 = vst [vmem:[%s3 + $0x8] sm:$0xf] %v729
    %794 = vst [vmem:[%s3 + $0xc] sm:$0xf] %v730
    %795 = vst [vmem:[%s3 + $0x10] sm:$0xf] %v731
    %796 = vst [vmem:[%s3 + $0x14] sm:$0xf] %v732
    %797 = vst [vmem:[%s3 + $0x18] sm:$0xf] %v733
    %798 = vst [vmem:[%s3 + $0x1c] sm:$0xf] %v734
    %799 = vst [vmem:[%s3 + $0x20] sm:$0xf] %v735
    %800 = vst [vmem:[%s3 + $0x24] sm:$0xf] %v736
    %801 = vst [vmem:[%s3 + $0x28] sm:$0xf] %v737
    %802 = vst [vmem:[%s3 + $0x2c] sm:$0xf] %v738
    %803 = vst [vmem:[%s3 + $0x30] sm:$0xf] %v739
    %804 = vst [vmem:[%s3 + $0x34] sm:$0xf] %v740
    %805 = vst [vmem:[%s3 + $0x38] sm:$0xf] %v741
    %806 = vst [vmem:[%s3 + $0x3c] sm:$0xf] %v742
    %807 = vst [vmem:[%s3 + $0x40] sm:$0xf] %v743
    %808 = vst [vmem:[%s3 + $0x44] sm:$0xf] %v744
    %809 = vst [vmem:[%s3 + $0x48] sm:$0xf] %v745
    %810 = vst [vmem:[%s3 + $0x4c] sm:$0xf] %v746
    %811 = vst [vmem:[%s3 + $0x50] sm:$0xf] %v747
    %812 = vst [vmem:[%s3 + $0x54] sm:$0xf] %v748
    %813 = vst [vmem:[%s3 + $0x58] sm:$0xf] %v749
    %814 = vst [vmem:[%s3 + $0x5c] sm:$0xf] %v750
    %815 = vst [vmem:[%s3 + $0x60] sm:$0xf] %v751
    %816 = vst [vmem:[%s3 + $0x64] sm:$0xf] %v752
    %817 = vst [vmem:[%s3 + $0x68] sm:$0xf] %v753
    %818 = vst [vmem:[%s3 + $0x6c] sm:$0xf] %v754
    %819 = vst [vmem:[%s3 + $0x70] sm:$0xf] %v755
    %820 = vst [vmem:[%s3 + $0x74] sm:$0xf] %v756
    %821 = vst [vmem:[%s3 + $0x78] sm:$0xf] %v757
    %822 = vst [vmem:[%s3 + $0x7c] sm:$0xf] %v758
  $region21: #{sgc_forward.4} parent=0 // pred_fallthru
    _
  // Predicated region
  $region22: #{sgc_forward.4} parent=0 // pred_check
    _
  $region23: #{sgc_forward.4} parent=0 // pred_check_branch
    %824 = sbr.rel (0) target = $region25
  $region24: #{sgc_forward.4} parent=0 // pred_region
    _
  $region25: #{sgc_forward.4} parent=0 // pred_fallthru
    _
  // Predicated region
  $region26: #{sgc_forward.4} parent=0 // pred_check
    _
  $region27: #{sgc_forward.4} parent=0 // pred_check_branch
    %826 = sbr.rel (0) target = $region29
  $region28: #{sgc_forward.4} parent=0 // pred_region
    _
  $region29: #{sgc_forward.4} parent=0 // pred_fallthru
    _

</llo_original>
